<compile_context>
chip_gen: v7x
topology: tpu7x:2x2x1
jax: 0.10.0
libtpu: 0.0.40
codegen_flags: <defaults>
</compile_context>

<pallas_src>
import jax
import jax.numpy as jnp
from jax import lax
from jax.experimental import pallas as pl
from jax.experimental.pallas import tpu as pltpu


def _round_up(x, m):
    return ((x + m - 1) // m) * m


def _decoder_kernel(mask_ref, x_ref, h0_ref, wx_ref, wh_ref, bx_ref, bh_ref,
                    wlin_ref, blin_ref, out_ref):
    T, B, Op = x_ref.shape
    Hp = wh_ref.shape[0]

    # Hoist weight loads / iota out of the recurrence (JAX does not CSE these).
    w_x = wx_ref[...]        # (Op, 3*Hp)  matmul dtype (bf16)
    w_h = wh_ref[...]        # (Hp, 3*Hp)  matmul dtype (bf16)
    b_x = bx_ref[...]        # (1, 3*Hp)   f32, r/z biases pre-summed, + b_in
    b_h = bh_ref[...]        # (1, 3*Hp)   f32, only the n-block (b_hn) nonzero
    w_lin = wlin_ref[...]    # (Hp, Op)    matmul dtype (bf16)
    b_lin = blin_ref[...]    # (1, Op)     f32, padded vocab lanes = -1e30
    iota = lax.broadcasted_iota(jnp.int32, (B, Op), 1)

    def step(t, carry):
        h, pred = carry                                   # (B,Hp) f32, (B,Op) f32

        # Recurrence-critical dot: depends only on h_{t-1}, so it overlaps with
        # the previous step's logits matmul / softmax / argmax.
        gh = jnp.dot(h.astype(w_h.dtype), w_h,
                     preferred_element_type=jnp.float32) + b_h

        # Feedback path: teacher one-hot where forced, else previous prediction.
        xin = jnp.where(mask_ref[t] != 0.0, x_ref[t], pred)         # one vselect
        gi = jnp.dot(xin.astype(w_x.dtype), w_x,
                     preferred_element_type=jnp.float32) + b_x

        # PyTorch GRUCell gate order r, z, n; each block Hp wide, lane aligned.
        r = jax.nn.sigmoid(gi[:, 0:Hp] + gh[:, 0:Hp])
        z = jax.nn.sigmoid(gi[:, Hp:2 * Hp] + gh[:, Hp:2 * Hp])
        n = jnp.tanh(gi[:, 2 * Hp:3 * Hp] + r * gh[:, 2 * Hp:3 * Hp])
        h_new = (1.0 - z) * n + z * h                     # padded lanes stay 0

        # Linear + log_softmax (lane-dense Op-wide output store).
        logits = jnp.dot(h_new.astype(w_lin.dtype), w_lin,
                         preferred_element_type=jnp.float32) + b_lin
        m = jnp.max(logits, axis=-1, keepdims=True)
        shifted = logits - m
        lse = jnp.log(jnp.sum(jnp.exp(shifted), axis=-1, keepdims=True))
        out_ref[t] = shifted - lse

        # argmax(log_softmax) == argmax(logits): shifted == 0 exactly at the
        # maxima (same f32 array minus its own max), first-index tie-break.
        first_max = jnp.min(jnp.where(shifted >= 0.0, iota, Op),
                            axis=-1, keepdims=True)
        pred_new = (iota == first_max).astype(jnp.float32)
        return h_new, pred_new

    h0 = h0_ref[...]
    pred0 = jnp.zeros((B, Op), jnp.float32)
    # Full unroll only for short recurrences; cap otherwise (64 vregs).
    lax.fori_loop(0, T, step, (h0, pred0), unroll=(T if T <= 8 else 4))


def decoder_pallas(x, h0, mask, params, matmul_dtype=jnp.bfloat16):
    """x: (T, B, O) one-hot float32, h0: (B, H), mask: (T, B, 1) in {0,1}."""
    wih, whh, bih, bhh, wlin, blin = params
    T, B, O = x.shape
    H = h0.shape[1]
    Op = _round_up(O, 128)
    Hp = _round_up(H, 128)
    f32 = jnp.float32

    # --- pad activations to lane-friendly shapes (padded lanes exact zeros) ---
    x_p = jnp.zeros((T, B, Op), f32).at[:, :, :O].set(x)
    h0_p = jnp.zeros((B, Hp), f32).at[:, :H].set(h0)

    # --- split, padded GRU weights; gate blocks [r | z | n] lane-aligned at Hp ---
    w_x = jnp.zeros((Op, 3 * Hp), f32)
    w_x = w_x.at[:O, 0:H].set(wih[:, 0:H])                           # r (from x)
    w_x = w_x.at[:O, Hp:Hp + H].set(wih[:, H:2 * H])                 # z (from x)
    w_x = w_x.at[:O, 2 * Hp:2 * Hp + H].set(wih[:, 2 * H:3 * H])     # n_x

    w_h = jnp.zeros((Hp, 3 * Hp), f32)
    w_h = w_h.at[:H, 0:H].set(whh[:, 0:H])                           # r (from h)
    w_h = w_h.at[:H, Hp:Hp + H].set(whh[:, H:2 * H])                 # z (from h)
    w_h = w_h.at[:H, 2 * Hp:2 * Hp + H].set(whh[:, 2 * H:3 * H])     # n_h

    b_x = jnp.zeros((1, 3 * Hp), f32)
    b_x = b_x.at[0, 0:H].set(bih[0, 0:H] + bhh[0, 0:H])              # r bias (pre-summed)
    b_x = b_x.at[0, Hp:Hp + H].set(bih[0, H:2 * H] + bhh[0, H:2 * H])  # z bias
    b_x = b_x.at[0, 2 * Hp:2 * Hp + H].set(bih[0, 2 * H:3 * H])      # b_in
    b_h = jnp.zeros((1, 3 * Hp), f32)
    b_h = b_h.at[0, 2 * Hp:2 * Hp + H].set(bhh[0, 2 * H:3 * H])      # b_hn (inside tanh's r*(...))

    w_lin = jnp.zeros((Hp, Op), f32).at[:H, :O].set(wlin)
    # Padded vocab lanes get a very negative bias so softmax / argmax ignore them.
    b_lin = jnp.full((1, Op), -1e30, f32).at[0, :O].set(blin[0])

    # bf16 MXU operands (cast once here; activations cast at the dots in-kernel).
    w_x = w_x.astype(matmul_dtype)
    w_h = w_h.astype(matmul_dtype)
    w_lin = w_lin.astype(matmul_dtype)

    vmem = pl.BlockSpec(memory_space=pltpu.MemorySpace.VMEM)
    out_p = pl.pallas_call(
        _decoder_kernel,
        out_shape=jax.ShapeDtypeStruct((T, B, Op), f32),
        in_specs=[vmem] * 9,          # everything resident in VMEM, single DMA each
        out_specs=vmem,
    )(mask, x_p, h0_p, w_x, w_h, b_x, b_h, w_lin, b_lin)
    return out_p[:, :, :O]


def decoder_ref(x, h0, mask, params, matmul_dtype=jnp.float32):
    """Pure-JAX reference matching the PyTorch Decoder.forward semantics.

    With matmul_dtype=bfloat16 it mirrors the kernel's bf16-operand / f32-acc
    matmuls so the (argmax-feedback) trajectories are comparable.
    """
    wih, whh, bih, bhh, wlin, blin = params
    T, B, O = x.shape
    H = h0.shape[1]
    md = matmul_dtype
    wih_c, whh_c, wlin_c = wih.astype(md), whh.astype(md), wlin.astype(md)
    h = h0
    pred = jnp.zeros((B, O), jnp.float32)
    outs = []
    for t in range(T):
        xin = jnp.where(mask[t] != 0.0, x[t], pred)
        gi = jnp.dot(xin.astype(md), wih_c, preferred_element_type=jnp.float32) + bih[0]
        gh = jnp.dot(h.astype(md), whh_c, preferred_element_type=jnp.float32) + bhh[0]
        r = jax.nn.sigmoid(gi[:, :H] + gh[:, :H])
        z = jax.nn.sigmoid(gi[:, H:2 * H] + gh[:, H:2 * H])
        n = jnp.tanh(gi[:, 2 * H:] + r * gh[:, 2 * H:])
        h = (1.0 - z) * n + z * h
        logits = jnp.dot(h.astype(md), wlin_c, preferred_element_type=jnp.float32) + blin[0]
        logp = jax.nn.log_softmax(logits, axis=-1)
        outs.append(logp)
        pred = jax.nn.one_hot(jnp.argmax(logp, axis=-1), O, dtype=jnp.float32)
    return jnp.stack(outs)


def make_forcing_mask(key, T, B, forcing_ratio):
    """Step 0: fully forced (ratio 1.0). Steps >0: int(B*ratio) random positions."""
    rows = [jnp.ones((B,), jnp.float32)]
    n_forced = int(B * forcing_ratio)
    for t in range(1, T):
        key, sub = jax.random.split(key)
        perm = jax.random.permutation(sub, B)
        row = jnp.zeros((B,), jnp.float32).at[perm[:n_forced]].set(1.0)
        rows.append(row)
    return jnp.stack(rows)[:, :, None]   # (T, B, 1)


if __name__ == "__main__":
    T, B, H, O = 6, 8, 32, 64   # seq len, batch, hidden_size, output_size
    forcing_ratio = 0.9

    key = jax.random.PRNGKey(0)
    k_idx, k_h, k_mask, k1, k2, k3, k4, k5, k6 = jax.random.split(key, 9)

    # One-hot teacher inputs (like make_input_vect / F.one_hot on char indices).
    idx = jax.random.randint(k_idx, (T, B), 0, O)
    x = jax.nn.one_hot(idx, O, dtype=jnp.float32)          # (T, B, O)

    # Encoder final hidden state surrogate (h.squeeze(0) in the reference).
    h0 = jax.random.normal(k_h, (B, H), jnp.float32) * 0.1

    # Deterministic GRUCell / Linear parameters (PyTorch-style uniform init).
    s = 1.0 / jnp.sqrt(jnp.float32(H))
    wih = jax.random.uniform(k1, (O, 3 * H), jnp.float32, -s, s)   # x @ W_ih^T
    whh = jax.random.uniform(k2, (H, 3 * H), jnp.float32, -s, s)   # h @ W_hh^T
    bih = jax.random.uniform(k3, (1, 3 * H), jnp.float32, -s, s)
    bhh = jax.random.uniform(k4, (1, 3 * H), jnp.float32, -s, s)
    wlin = jax.random.uniform(k5, (H, O), jnp.float32, -s, s)      # h @ W_lin^T
    blin = jax.random.uniform(k6, (1, O), jnp.float32, -s, s)
    params = (wih, whh, bih, bhh, wlin, blin)

    mask = make_forcing_mask(k_mask, T, B, forcing_ratio)

    out = decoder_pallas(x, h0, mask, params)              # bf16 MXU operands
    out = jax.block_until_ready(out)
    assert out.shape == (T, B, O)

    # Validate against the bf16-matmul-matched reference (same feedback
    # trajectory); the pure-f32 reference can legitimately diverge through the
    # hard-argmax feedback once matmul operands are bf16.
    ref = decoder_ref(x, h0, mask, params, matmul_dtype=jnp.bfloat16)
    assert jnp.allclose(out, ref, atol=2e-3, rtol=2e-3), "mismatch vs JAX reference"

    print("KERNEL_OK")
</pallas_src>

<mosaic_0001>
module attributes {stable_mosaic.version = 11 : i64} {
  func.func @_decoder_kernel(%arg0: memref<6x8x1xf32, #tpu.memory_space<vmem>>, %arg1: memref<6x8x128xf32, #tpu.memory_space<vmem>>, %arg2: memref<8x128xf32, #tpu.memory_space<vmem>>, %arg3: memref<128x384xbf16, #tpu.memory_space<vmem>>, %arg4: memref<128x384xbf16, #tpu.memory_space<vmem>>, %arg5: memref<1x384xf32, #tpu.memory_space<vmem>>, %arg6: memref<1x384xf32, #tpu.memory_space<vmem>>, %arg7: memref<128x128xbf16, #tpu.memory_space<vmem>>, %arg8: memref<1x128xf32, #tpu.memory_space<vmem>>, %arg9: memref<6x8x128xf32, #tpu.memory_space<vmem>>) attributes {dimension_semantics = [], scalar_prefetch = 0 : i64, scratch_operands = 0 : i64, tpu.core_type = #tpu.core_type<tc>} {
    %c0 = arith.constant 0 : index
    %c0_0 = arith.constant 0 : index
    %0 = vector.load %arg3[%c0, %c0_0] : memref<128x384xbf16, #tpu.memory_space<vmem>>, vector<128x384xbf16>
    %c0_1 = arith.constant 0 : index
    %c0_2 = arith.constant 0 : index
    %1 = vector.load %arg4[%c0_1, %c0_2] : memref<128x384xbf16, #tpu.memory_space<vmem>>, vector<128x384xbf16>
    %c0_3 = arith.constant 0 : index
    %c0_4 = arith.constant 0 : index
    %2 = vector.load %arg5[%c0_3, %c0_4] : memref<1x384xf32, #tpu.memory_space<vmem>>, vector<1x384xf32>
    %c0_5 = arith.constant 0 : index
    %c0_6 = arith.constant 0 : index
    %3 = vector.load %arg6[%c0_5, %c0_6] : memref<1x384xf32, #tpu.memory_space<vmem>>, vector<1x384xf32>
    %c0_7 = arith.constant 0 : index
    %c0_8 = arith.constant 0 : index
    %4 = vector.load %arg7[%c0_7, %c0_8] : memref<128x128xbf16, #tpu.memory_space<vmem>>, vector<128x128xbf16>
    %c0_9 = arith.constant 0 : index
    %c0_10 = arith.constant 0 : index
    %5 = vector.load %arg8[%c0_9, %c0_10] : memref<1x128xf32, #tpu.memory_space<vmem>>, vector<1x128xf32>
    %6 = tpu.iota {dimensions = array<i32: 1>} : vector<8x128xi32>
    %c0_11 = arith.constant 0 : index
    %c0_12 = arith.constant 0 : index
    %7 = vector.load %arg2[%c0_11, %c0_12] : memref<8x128xf32, #tpu.memory_space<vmem>>, vector<8x128xf32>
    %cst = arith.constant 0.000000e+00 : f32
    %8 = vector.broadcast %cst : f32 to vector<8x128xf32>
    %c0_i32 = arith.constant 0 : i32
    %9 = arith.truncf %7 : vector<8x128xf32> to vector<8x128xbf16>
    %cst_13 = arith.constant dense<0.000000e+00> : vector<8x384xf32>
    %10 = tpu.matmul %9, %1, %cst_13 {dimension_numbers = #tpu.dot_dimension_numbers<[1], [0], [0], [1], [0, 0, 1, 1], [], []>} : vector<8x128xbf16>, vector<128x384xbf16>, vector<8x384xf32> -> vector<8x384xf32>
    %11 = vector.broadcast %3 : vector<1x384xf32> to vector<8x384xf32>
    %12 = arith.addf %10, %11 : vector<8x384xf32>
    %13 = arith.index_cast %c0_i32 : i32 to index
    %c0_14 = arith.constant 0 : index
    %c0_15 = arith.constant 0 : index
    %14 = vector.load %arg0[%13, %c0_14, %c0_15] : memref<6x8x1xf32, #tpu.memory_space<vmem>>, vector<1x8x1xf32>
    %15 = vector.shape_cast %14 : vector<1x8x1xf32> to vector<8x1xf32>
    %cst_16 = arith.constant 0.000000e+00 : f32
    %16 = vector.broadcast %cst_16 : f32 to vector<8x1xf32>
    %17 = arith.cmpf one, %15, %16 : vector<8x1xf32>
    %18 = arith.index_cast %c0_i32 : i32 to index
    %c0_17 = arith.constant 0 : index
    %c0_18 = arith.constant 0 : index
    %19 = vector.load %arg1[%18, %c0_17, %c0_18] : memref<6x8x128xf32, #tpu.memory_space<vmem>>, vector<1x8x128xf32>
    %20 = vector.shape_cast %19 : vector<1x8x128xf32> to vector<8x128xf32>
    %21 = vector.shape_cast %17 : vector<8x1xi1> to vector<8x1xi1>
    %22 = vector.broadcast %21 : vector<8x1xi1> to vector<8x128xi1>
    %23 = arith.select %22, %20, %8 : vector<8x128xi1>, vector<8x128xf32>
    %24 = arith.truncf %23 : vector<8x128xf32> to vector<8x128xbf16>
    %cst_19 = arith.constant dense<0.000000e+00> : vector<8x384xf32>
    %25 = tpu.matmul %24, %0, %cst_19 {dimension_numbers = #tpu.dot_dimension_numbers<[1], [0], [0], [1], [0, 0, 1, 1], [], []>} : vector<8x128xbf16>, vector<128x384xbf16>, vector<8x384xf32> -> vector<8x384xf32>
    %26 = vector.broadcast %2 : vector<1x384xf32> to vector<8x384xf32>
    %27 = arith.addf %25, %26 : vector<8x384xf32>
    %28 = vector.extract_strided_slice %27 {offsets = [0, 0], sizes = [8, 128], strides = [1, 1]} : vector<8x384xf32> to vector<8x128xf32>
    %29 = vector.extract_strided_slice %12 {offsets = [0, 0], sizes = [8, 128], strides = [1, 1]} : vector<8x384xf32> to vector<8x128xf32>
    %30 = arith.addf %28, %29 : vector<8x128xf32>
    %31 = arith.negf %30 : vector<8x128xf32>
    %32 = math.exp %31 : vector<8x128xf32>
    %cst_20 = arith.constant 1.000000e+00 : f32
    %33 = vector.broadcast %cst_20 : f32 to vector<8x128xf32>
    %34 = arith.addf %33, %32 : vector<8x128xf32>
    %35 = arith.divf %33, %34 : vector<8x128xf32>
    %36 = vector.extract_strided_slice %27 {offsets = [0, 128], sizes = [8, 128], strides = [1, 1]} : vector<8x384xf32> to vector<8x128xf32>
    %37 = vector.extract_strided_slice %12 {offsets = [0, 128], sizes = [8, 128], strides = [1, 1]} : vector<8x384xf32> to vector<8x128xf32>
    %38 = arith.addf %36, %37 : vector<8x128xf32>
    %39 = arith.negf %38 : vector<8x128xf32>
    %40 = math.exp %39 : vector<8x128xf32>
    %cst_21 = arith.constant 1.000000e+00 : f32
    %41 = vector.broadcast %cst_21 : f32 to vector<8x128xf32>
    %42 = arith.addf %41, %40 : vector<8x128xf32>
    %43 = arith.divf %41, %42 : vector<8x128xf32>
    %44 = vector.extract_strided_slice %27 {offsets = [0, 256], sizes = [8, 128], strides = [1, 1]} : vector<8x384xf32> to vector<8x128xf32>
    %45 = vector.extract_strided_slice %12 {offsets = [0, 256], sizes = [8, 128], strides = [1, 1]} : vector<8x384xf32> to vector<8x128xf32>
    %46 = arith.mulf %35, %45 : vector<8x128xf32>
    %47 = arith.addf %44, %46 : vector<8x128xf32>
    %48 = math.tanh %47 : vector<8x128xf32>
    %cst_22 = arith.constant 1.000000e+00 : f32
    %49 = vector.broadcast %cst_22 : f32 to vector<8x128xf32>
    %50 = arith.subf %49, %43 : vector<8x128xf32>
    %51 = arith.mulf %50, %48 : vector<8x128xf32>
    %52 = arith.mulf %43, %7 : vector<8x128xf32>
    %53 = arith.addf %51, %52 : vector<8x128xf32>
    %54 = arith.truncf %53 : vector<8x128xf32> to vector<8x128xbf16>
    %cst_23 = arith.constant dense<0.000000e+00> : vector<8x128xf32>
    %55 = tpu.matmul %54, %4, %cst_23 {dimension_numbers = #tpu.dot_dimension_numbers<[1], [0], [0], [1], [0, 0, 1, 1], [], []>} : vector<8x128xbf16>, vector<128x128xbf16>, vector<8x128xf32> -> vector<8x128xf32>
    %56 = vector.broadcast %5 : vector<1x128xf32> to vector<8x128xf32>
    %57 = arith.addf %55, %56 : vector<8x128xf32>
    %cst_24 = arith.constant dense<0xFF800000> : vector<8xf32>
    %58 = vector.multi_reduction <maximumf>, %57, %cst_24 [1] : vector<8x128xf32> to vector<8xf32>
    %59 = vector.shape_cast %58 : vector<8xf32> to vector<8x1xf32>
    %60 = vector.broadcast %59 : vector<8x1xf32> to vector<8x128xf32>
    %61 = arith.subf %57, %60 : vector<8x128xf32>
    %62 = math.exp %61 : vector<8x128xf32>
    %cst_25 = arith.constant dense<0.000000e+00> : vector<8xf32>
    %63 = vector.multi_reduction <add>, %62, %cst_25 [1] : vector<8x128xf32> to vector<8xf32>
    %64 = vector.shape_cast %63 : vector<8xf32> to vector<8x1xf32>
    %65 = math.log %64 : vector<8x1xf32>
    %66 = vector.broadcast %65 : vector<8x1xf32> to vector<8x128xf32>
    %67 = arith.subf %61, %66 : vector<8x128xf32>
    %68 = arith.index_cast %c0_i32 : i32 to index
    %c0_26 = arith.constant 0 : index
    %c0_27 = arith.constant 0 : index
    %69 = vector.load %arg9[%68, %c0_26, %c0_27] : memref<6x8x128xf32, #tpu.memory_space<vmem>>, vector<1x8x128xf32>
    %70 = vector.shape_cast %69 : vector<1x8x128xf32> to vector<8x128xf32>
    %71 = vector.shape_cast %67 : vector<8x128xf32> to vector<1x8x128xf32>
    tpu.vector_store %arg9[%68, %c0_26, %c0_27], %71 {strides = array<i32>} : memref<6x8x128xf32, #tpu.memory_space<vmem>>, vector<1x8x128xf32>,
    %cst_28 = arith.constant 0.000000e+00 : f32
    %72 = vector.broadcast %cst_28 : f32 to vector<8x128xf32>
    %73 = arith.cmpf oge, %61, %72 : vector<8x128xf32>
    %c128_i32 = arith.constant 128 : i32
    %74 = vector.broadcast %c128_i32 : i32 to vector<8x128xi32>
    %75 = arith.select %73, %6, %74 : vector<8x128xi1>, vector<8x128xi32>
    %cst_29 = arith.constant dense<2147483647> : vector<8xi32>
    %76 = vector.multi_reduction <minsi>, %75, %cst_29 [1] : vector<8x128xi32> to vector<8xi32>
    %77 = vector.shape_cast %76 : vector<8xi32> to vector<8x1xi32>
    %78 = vector.broadcast %77 : vector<8x1xi32> to vector<8x128xi32>
    %79 = arith.cmpi eq, %6, %78 : vector<8x128xi32>
    %80 = arith.extui %79 : vector<8x128xi1> to vector<8x128xi32>
    %81 = arith.sitofp %80 : vector<8x128xi32> to vector<8x128xf32>
    %c1_i32 = arith.constant 1 : i32
    %82 = arith.truncf %53 : vector<8x128xf32> to vector<8x128xbf16>
    %cst_30 = arith.constant dense<0.000000e+00> : vector<8x384xf32>
    %83 = tpu.matmul %82, %1, %cst_30 {dimension_numbers = #tpu.dot_dimension_numbers<[1], [0], [0], [1], [0, 0, 1, 1], [], []>} : vector<8x128xbf16>, vector<128x384xbf16>, vector<8x384xf32> -> vector<8x384xf32>
    %84 = vector.broadcast %3 : vector<1x384xf32> to vector<8x384xf32>
    %85 = arith.addf %83, %84 : vector<8x384xf32>
    %86 = arith.index_cast %c1_i32 : i32 to index
    %c0_31 = arith.constant 0 : index
    %c0_32 = arith.constant 0 : index
    %87 = vector.load %arg0[%86, %c0_31, %c0_32] : memref<6x8x1xf32, #tpu.memory_space<vmem>>, vector<1x8x1xf32>
    %88 = vector.shape_cast %87 : vector<1x8x1xf32> to vector<8x1xf32>
    %cst_33 = arith.constant 0.000000e+00 : f32
    %89 = vector.broadcast %cst_33 : f32 to vector<8x1xf32>
    %90 = arith.cmpf one, %88, %89 : vector<8x1xf32>
    %91 = arith.index_cast %c1_i32 : i32 to index
    %c0_34 = arith.constant 0 : index
    %c0_35 = arith.constant 0 : index
    %92 = vector.load %arg1[%91, %c0_34, %c0_35] : memref<6x8x128xf32, #tpu.memory_space<vmem>>, vector<1x8x128xf32>
    %93 = vector.shape_cast %92 : vector<1x8x128xf32> to vector<8x128xf32>
    %94 = vector.shape_cast %90 : vector<8x1xi1> to vector<8x1xi1>
    %95 = vector.broadcast %94 : vector<8x1xi1> to vector<8x128xi1>
    %96 = arith.select %95, %93, %81 : vector<8x128xi1>, vector<8x128xf32>
    %97 = arith.truncf %96 : vector<8x128xf32> to vector<8x128xbf16>
    %cst_36 = arith.constant dense<0.000000e+00> : vector<8x384xf32>
    %98 = tpu.matmul %97, %0, %cst_36 {dimension_numbers = #tpu.dot_dimension_numbers<[1], [0], [0], [1], [0, 0, 1, 1], [], []>} : vector<8x128xbf16>, vector<128x384xbf16>, vector<8x384xf32> -> vector<8x384xf32>
    %99 = vector.broadcast %2 : vector<1x384xf32> to vector<8x384xf32>
    %100 = arith.addf %98, %99 : vector<8x384xf32>
    %101 = vector.extract_strided_slice %100 {offsets = [0, 0], sizes = [8, 128], strides = [1, 1]} : vector<8x384xf32> to vector<8x128xf32>
    %102 = vector.extract_strided_slice %85 {offsets = [0, 0], sizes = [8, 128], strides = [1, 1]} : vector<8x384xf32> to vector<8x128xf32>
    %103 = arith.addf %101, %102 : vector<8x128xf32>
    %104 = arith.negf %103 : vector<8x128xf32>
    %105 = math.exp %104 : vector<8x128xf32>
    %cst_37 = arith.constant 1.000000e+00 : f32
    %106 = vector.broadcast %cst_37 : f32 to vector<8x128xf32>
    %107 = arith.addf %106, %105 : vector<8x128xf32>
    %108 = arith.divf %106, %107 : vector<8x128xf32>
    %109 = vector.extract_strided_slice %100 {offsets = [0, 128], sizes = [8, 128], strides = [1, 1]} : vector<8x384xf32> to vector<8x128xf32>
    %110 = vector.extract_strided_slice %85 {offsets = [0, 128], sizes = [8, 128], strides = [1, 1]} : vector<8x384xf32> to vector<8x128xf32>
    %111 = arith.addf %109, %110 : vector<8x128xf32>
    %112 = arith.negf %111 : vector<8x128xf32>
    %113 = math.exp %112 : vector<8x128xf32>
    %cst_38 = arith.constant 1.000000e+00 : f32
    %114 = vector.broadcast %cst_38 : f32 to vector<8x128xf32>
    %115 = arith.addf %114, %113 : vector<8x128xf32>
    %116 = arith.divf %114, %115 : vector<8x128xf32>
    %117 = vector.extract_strided_slice %100 {offsets = [0, 256], sizes = [8, 128], strides = [1, 1]} : vector<8x384xf32> to vector<8x128xf32>
    %118 = vector.extract_strided_slice %85 {offsets = [0, 256], sizes = [8, 128], strides = [1, 1]} : vector<8x384xf32> to vector<8x128xf32>
    %119 = arith.mulf %108, %118 : vector<8x128xf32>
    %120 = arith.addf %117, %119 : vector<8x128xf32>
    %121 = math.tanh %120 : vector<8x128xf32>
    %cst_39 = arith.constant 1.000000e+00 : f32
    %122 = vector.broadcast %cst_39 : f32 to vector<8x128xf32>
    %123 = arith.subf %122, %116 : vector<8x128xf32>
    %124 = arith.mulf %123, %121 : vector<8x128xf32>
    %125 = arith.mulf %116, %53 : vector<8x128xf32>
    %126 = arith.addf %124, %125 : vector<8x128xf32>
    %127 = arith.truncf %126 : vector<8x128xf32> to vector<8x128xbf16>
    %cst_40 = arith.constant dense<0.000000e+00> : vector<8x128xf32>
    %128 = tpu.matmul %127, %4, %cst_40 {dimension_numbers = #tpu.dot_dimension_numbers<[1], [0], [0], [1], [0, 0, 1, 1], [], []>} : vector<8x128xbf16>, vector<128x128xbf16>, vector<8x128xf32> -> vector<8x128xf32>
    %129 = vector.broadcast %5 : vector<1x128xf32> to vector<8x128xf32>
    %130 = arith.addf %128, %129 : vector<8x128xf32>
    %cst_41 = arith.constant dense<0xFF800000> : vector<8xf32>
    %131 = vector.multi_reduction <maximumf>, %130, %cst_41 [1] : vector<8x128xf32> to vector<8xf32>
    %132 = vector.shape_cast %131 : vector<8xf32> to vector<8x1xf32>
    %133 = vector.broadcast %132 : vector<8x1xf32> to vector<8x128xf32>
    %134 = arith.subf %130, %133 : vector<8x128xf32>
    %135 = math.exp %134 : vector<8x128xf32>
    %cst_42 = arith.constant dense<0.000000e+00> : vector<8xf32>
    %136 = vector.multi_reduction <add>, %135, %cst_42 [1] : vector<8x128xf32> to vector<8xf32>
    %137 = vector.shape_cast %136 : vector<8xf32> to vector<8x1xf32>
    %138 = math.log %137 : vector<8x1xf32>
    %139 = vector.broadcast %138 : vector<8x1xf32> to vector<8x128xf32>
    %140 = arith.subf %134, %139 : vector<8x128xf32>
    %141 = arith.index_cast %c1_i32 : i32 to index
    %c0_43 = arith.constant 0 : index
    %c0_44 = arith.constant 0 : index
    %142 = vector.load %arg9[%141, %c0_43, %c0_44] : memref<6x8x128xf32, #tpu.memory_space<vmem>>, vector<1x8x128xf32>
    %143 = vector.shape_cast %142 : vector<1x8x128xf32> to vector<8x128xf32>
    %144 = vector.shape_cast %140 : vector<8x128xf32> to vector<1x8x128xf32>
    tpu.vector_store %arg9[%141, %c0_43, %c0_44], %144 {strides = array<i32>} : memref<6x8x128xf32, #tpu.memory_space<vmem>>, vector<1x8x128xf32>,
    %cst_45 = arith.constant 0.000000e+00 : f32
    %145 = vector.broadcast %cst_45 : f32 to vector<8x128xf32>
    %146 = arith.cmpf oge, %134, %145 : vector<8x128xf32>
    %c128_i32_46 = arith.constant 128 : i32
    %147 = vector.broadcast %c128_i32_46 : i32 to vector<8x128xi32>
    %148 = arith.select %146, %6, %147 : vector<8x128xi1>, vector<8x128xi32>
    %cst_47 = arith.constant dense<2147483647> : vector<8xi32>
    %149 = vector.multi_reduction <minsi>, %148, %cst_47 [1] : vector<8x128xi32> to vector<8xi32>
    %150 = vector.shape_cast %149 : vector<8xi32> to vector<8x1xi32>
    %151 = vector.broadcast %150 : vector<8x1xi32> to vector<8x128xi32>
    %152 = arith.cmpi eq, %6, %151 : vector<8x128xi32>
    %153 = arith.extui %152 : vector<8x128xi1> to vector<8x128xi32>
    %154 = arith.sitofp %153 : vector<8x128xi32> to vector<8x128xf32>
    %c2_i32 = arith.constant 2 : i32
    %155 = arith.truncf %126 : vector<8x128xf32> to vector<8x128xbf16>
    %cst_48 = arith.constant dense<0.000000e+00> : vector<8x384xf32>
    %156 = tpu.matmul %155, %1, %cst_48 {dimension_numbers = #tpu.dot_dimension_numbers<[1], [0], [0], [1], [0, 0, 1, 1], [], []>} : vector<8x128xbf16>, vector<128x384xbf16>, vector<8x384xf32> -> vector<8x384xf32>
    %157 = vector.broadcast %3 : vector<1x384xf32> to vector<8x384xf32>
    %158 = arith.addf %156, %157 : vector<8x384xf32>
    %159 = arith.index_cast %c2_i32 : i32 to index
    %c0_49 = arith.constant 0 : index
    %c0_50 = arith.constant 0 : index
    %160 = vector.load %arg0[%159, %c0_49, %c0_50] : memref<6x8x1xf32, #tpu.memory_space<vmem>>, vector<1x8x1xf32>
    %161 = vector.shape_cast %160 : vector<1x8x1xf32> to vector<8x1xf32>
    %cst_51 = arith.constant 0.000000e+00 : f32
    %162 = vector.broadcast %cst_51 : f32 to vector<8x1xf32>
    %163 = arith.cmpf one, %161, %162 : vector<8x1xf32>
    %164 = arith.index_cast %c2_i32 : i32 to index
    %c0_52 = arith.constant 0 : index
    %c0_53 = arith.constant 0 : index
    %165 = vector.load %arg1[%164, %c0_52, %c0_53] : memref<6x8x128xf32, #tpu.memory_space<vmem>>, vector<1x8x128xf32>
    %166 = vector.shape_cast %165 : vector<1x8x128xf32> to vector<8x128xf32>
    %167 = vector.shape_cast %163 : vector<8x1xi1> to vector<8x1xi1>
    %168 = vector.broadcast %167 : vector<8x1xi1> to vector<8x128xi1>
    %169 = arith.select %168, %166, %154 : vector<8x128xi1>, vector<8x128xf32>
    %170 = arith.truncf %169 : vector<8x128xf32> to vector<8x128xbf16>
    %cst_54 = arith.constant dense<0.000000e+00> : vector<8x384xf32>
    %171 = tpu.matmul %170, %0, %cst_54 {dimension_numbers = #tpu.dot_dimension_numbers<[1], [0], [0], [1], [0, 0, 1, 1], [], []>} : vector<8x128xbf16>, vector<128x384xbf16>, vector<8x384xf32> -> vector<8x384xf32>
    %172 = vector.broadcast %2 : vector<1x384xf32> to vector<8x384xf32>
    %173 = arith.addf %171, %172 : vector<8x384xf32>
    %174 = vector.extract_strided_slice %173 {offsets = [0, 0], sizes = [8, 128], strides = [1, 1]} : vector<8x384xf32> to vector<8x128xf32>
    %175 = vector.extract_strided_slice %158 {offsets = [0, 0], sizes = [8, 128], strides = [1, 1]} : vector<8x384xf32> to vector<8x128xf32>
    %176 = arith.addf %174, %175 : vector<8x128xf32>
    %177 = arith.negf %176 : vector<8x128xf32>
    %178 = math.exp %177 : vector<8x128xf32>
    %cst_55 = arith.constant 1.000000e+00 : f32
    %179 = vector.broadcast %cst_55 : f32 to vector<8x128xf32>
    %180 = arith.addf %179, %178 : vector<8x128xf32>
    %181 = arith.divf %179, %180 : vector<8x128xf32>
    %182 = vector.extract_strided_slice %173 {offsets = [0, 128], sizes = [8, 128], strides = [1, 1]} : vector<8x384xf32> to vector<8x128xf32>
    %183 = vector.extract_strided_slice %158 {offsets = [0, 128], sizes = [8, 128], strides = [1, 1]} : vector<8x384xf32> to vector<8x128xf32>
    %184 = arith.addf %182, %183 : vector<8x128xf32>
    %185 = arith.negf %184 : vector<8x128xf32>
    %186 = math.exp %185 : vector<8x128xf32>
    %cst_56 = arith.constant 1.000000e+00 : f32
    %187 = vector.broadcast %cst_56 : f32 to vector<8x128xf32>
    %188 = arith.addf %187, %186 : vector<8x128xf32>
    %189 = arith.divf %187, %188 : vector<8x128xf32>
    %190 = vector.extract_strided_slice %173 {offsets = [0, 256], sizes = [8, 128], strides = [1, 1]} : vector<8x384xf32> to vector<8x128xf32>
    %191 = vector.extract_strided_slice %158 {offsets = [0, 256], sizes = [8, 128], strides = [1, 1]} : vector<8x384xf32> to vector<8x128xf32>
    %192 = arith.mulf %181, %191 : vector<8x128xf32>
    %193 = arith.addf %190, %192 : vector<8x128xf32>
    %194 = math.tanh %193 : vector<8x128xf32>
    %cst_57 = arith.constant 1.000000e+00 : f32
    %195 = vector.broadcast %cst_57 : f32 to vector<8x128xf32>
    %196 = arith.subf %195, %189 : vector<8x128xf32>
    %197 = arith.mulf %196, %194 : vector<8x128xf32>
    %198 = arith.mulf %189, %126 : vector<8x128xf32>
    %199 = arith.addf %197, %198 : vector<8x128xf32>
    %200 = arith.truncf %199 : vector<8x128xf32> to vector<8x128xbf16>
    %cst_58 = arith.constant dense<0.000000e+00> : vector<8x128xf32>
    %201 = tpu.matmul %200, %4, %cst_58 {dimension_numbers = #tpu.dot_dimension_numbers<[1], [0], [0], [1], [0, 0, 1, 1], [], []>} : vector<8x128xbf16>, vector<128x128xbf16>, vector<8x128xf32> -> vector<8x128xf32>
    %202 = vector.broadcast %5 : vector<1x128xf32> to vector<8x128xf32>
    %203 = arith.addf %201, %202 : vector<8x128xf32>
    %cst_59 = arith.constant dense<0xFF800000> : vector<8xf32>
    %204 = vector.multi_reduction <maximumf>, %203, %cst_59 [1] : vector<8x128xf32> to vector<8xf32>
    %205 = vector.shape_cast %204 : vector<8xf32> to vector<8x1xf32>
    %206 = vector.broadcast %205 : vector<8x1xf32> to vector<8x128xf32>
    %207 = arith.subf %203, %206 : vector<8x128xf32>
    %208 = math.exp %207 : vector<8x128xf32>
    %cst_60 = arith.constant dense<0.000000e+00> : vector<8xf32>
    %209 = vector.multi_reduction <add>, %208, %cst_60 [1] : vector<8x128xf32> to vector<8xf32>
    %210 = vector.shape_cast %209 : vector<8xf32> to vector<8x1xf32>
    %211 = math.log %210 : vector<8x1xf32>
    %212 = vector.broadcast %211 : vector<8x1xf32> to vector<8x128xf32>
    %213 = arith.subf %207, %212 : vector<8x128xf32>
    %214 = arith.index_cast %c2_i32 : i32 to index
    %c0_61 = arith.constant 0 : index
    %c0_62 = arith.constant 0 : index
    %215 = vector.load %arg9[%214, %c0_61, %c0_62] : memref<6x8x128xf32, #tpu.memory_space<vmem>>, vector<1x8x128xf32>
    %216 = vector.shape_cast %215 : vector<1x8x128xf32> to vector<8x128xf32>
    %217 = vector.shape_cast %213 : vector<8x128xf32> to vector<1x8x128xf32>
    tpu.vector_store %arg9[%214, %c0_61, %c0_62], %217 {strides = array<i32>} : memref<6x8x128xf32, #tpu.memory_space<vmem>>, vector<1x8x128xf32>,
    %cst_63 = arith.constant 0.000000e+00 : f32
    %218 = vector.broadcast %cst_63 : f32 to vector<8x128xf32>
    %219 = arith.cmpf oge, %207, %218 : vector<8x128xf32>
    %c128_i32_64 = arith.constant 128 : i32
    %220 = vector.broadcast %c128_i32_64 : i32 to vector<8x128xi32>
    %221 = arith.select %219, %6, %220 : vector<8x128xi1>, vector<8x128xi32>
    %cst_65 = arith.constant dense<2147483647> : vector<8xi32>
    %222 = vector.multi_reduction <minsi>, %221, %cst_65 [1] : vector<8x128xi32> to vector<8xi32>
    %223 = vector.shape_cast %222 : vector<8xi32> to vector<8x1xi32>
    %224 = vector.broadcast %223 : vector<8x1xi32> to vector<8x128xi32>
    %225 = arith.cmpi eq, %6, %224 : vector<8x128xi32>
    %226 = arith.extui %225 : vector<8x128xi1> to vector<8x128xi32>
    %227 = arith.sitofp %226 : vector<8x128xi32> to vector<8x128xf32>
    %c3_i32 = arith.constant 3 : i32
    %228 = arith.truncf %199 : vector<8x128xf32> to vector<8x128xbf16>
    %cst_66 = arith.constant dense<0.000000e+00> : vector<8x384xf32>
    %229 = tpu.matmul %228, %1, %cst_66 {dimension_numbers = #tpu.dot_dimension_numbers<[1], [0], [0], [1], [0, 0, 1, 1], [], []>} : vector<8x128xbf16>, vector<128x384xbf16>, vector<8x384xf32> -> vector<8x384xf32>
    %230 = vector.broadcast %3 : vector<1x384xf32> to vector<8x384xf32>
    %231 = arith.addf %229, %230 : vector<8x384xf32>
    %232 = arith.index_cast %c3_i32 : i32 to index
    %c0_67 = arith.constant 0 : index
    %c0_68 = arith.constant 0 : index
    %233 = vector.load %arg0[%232, %c0_67, %c0_68] : memref<6x8x1xf32, #tpu.memory_space<vmem>>, vector<1x8x1xf32>
    %234 = vector.shape_cast %233 : vector<1x8x1xf32> to vector<8x1xf32>
    %cst_69 = arith.constant 0.000000e+00 : f32
    %235 = vector.broadcast %cst_69 : f32 to vector<8x1xf32>
    %236 = arith.cmpf one, %234, %235 : vector<8x1xf32>
    %237 = arith.index_cast %c3_i32 : i32 to index
    %c0_70 = arith.constant 0 : index
    %c0_71 = arith.constant 0 : index
    %238 = vector.load %arg1[%237, %c0_70, %c0_71] : memref<6x8x128xf32, #tpu.memory_space<vmem>>, vector<1x8x128xf32>
    %239 = vector.shape_cast %238 : vector<1x8x128xf32> to vector<8x128xf32>
    %240 = vector.shape_cast %236 : vector<8x1xi1> to vector<8x1xi1>
    %241 = vector.broadcast %240 : vector<8x1xi1> to vector<8x128xi1>
    %242 = arith.select %241, %239, %227 : vector<8x128xi1>, vector<8x128xf32>
    %243 = arith.truncf %242 : vector<8x128xf32> to vector<8x128xbf16>
    %cst_72 = arith.constant dense<0.000000e+00> : vector<8x384xf32>
    %244 = tpu.matmul %243, %0, %cst_72 {dimension_numbers = #tpu.dot_dimension_numbers<[1], [0], [0], [1], [0, 0, 1, 1], [], []>} : vector<8x128xbf16>, vector<128x384xbf16>, vector<8x384xf32> -> vector<8x384xf32>
    %245 = vector.broadcast %2 : vector<1x384xf32> to vector<8x384xf32>
    %246 = arith.addf %244, %245 : vector<8x384xf32>
    %247 = vector.extract_strided_slice %246 {offsets = [0, 0], sizes = [8, 128], strides = [1, 1]} : vector<8x384xf32> to vector<8x128xf32>
    %248 = vector.extract_strided_slice %231 {offsets = [0, 0], sizes = [8, 128], strides = [1, 1]} : vector<8x384xf32> to vector<8x128xf32>
    %249 = arith.addf %247, %248 : vector<8x128xf32>
    %250 = arith.negf %249 : vector<8x128xf32>
    %251 = math.exp %250 : vector<8x128xf32>
    %cst_73 = arith.constant 1.000000e+00 : f32
    %252 = vector.broadcast %cst_73 : f32 to vector<8x128xf32>
    %253 = arith.addf %252, %251 : vector<8x128xf32>
    %254 = arith.divf %252, %253 : vector<8x128xf32>
    %255 = vector.extract_strided_slice %246 {offsets = [0, 128], sizes = [8, 128], strides = [1, 1]} : vector<8x384xf32> to vector<8x128xf32>
    %256 = vector.extract_strided_slice %231 {offsets = [0, 128], sizes = [8, 128], strides = [1, 1]} : vector<8x384xf32> to vector<8x128xf32>
    %257 = arith.addf %255, %256 : vector<8x128xf32>
    %258 = arith.negf %257 : vector<8x128xf32>
    %259 = math.exp %258 : vector<8x128xf32>
    %cst_74 = arith.constant 1.000000e+00 : f32
    %260 = vector.broadcast %cst_74 : f32 to vector<8x128xf32>
    %261 = arith.addf %260, %259 : vector<8x128xf32>
    %262 = arith.divf %260, %261 : vector<8x128xf32>
    %263 = vector.extract_strided_slice %246 {offsets = [0, 256], sizes = [8, 128], strides = [1, 1]} : vector<8x384xf32> to vector<8x128xf32>
    %264 = vector.extract_strided_slice %231 {offsets = [0, 256], sizes = [8, 128], strides = [1, 1]} : vector<8x384xf32> to vector<8x128xf32>
    %265 = arith.mulf %254, %264 : vector<8x128xf32>
    %266 = arith.addf %263, %265 : vector<8x128xf32>
    %267 = math.tanh %266 : vector<8x128xf32>
    %cst_75 = arith.constant 1.000000e+00 : f32
    %268 = vector.broadcast %cst_75 : f32 to vector<8x128xf32>
    %269 = arith.subf %268, %262 : vector<8x128xf32>
    %270 = arith.mulf %269, %267 : vector<8x128xf32>
    %271 = arith.mulf %262, %199 : vector<8x128xf32>
    %272 = arith.addf %270, %271 : vector<8x128xf32>
    %273 = arith.truncf %272 : vector<8x128xf32> to vector<8x128xbf16>
    %cst_76 = arith.constant dense<0.000000e+00> : vector<8x128xf32>
    %274 = tpu.matmul %273, %4, %cst_76 {dimension_numbers = #tpu.dot_dimension_numbers<[1], [0], [0], [1], [0, 0, 1, 1], [], []>} : vector<8x128xbf16>, vector<128x128xbf16>, vector<8x128xf32> -> vector<8x128xf32>
    %275 = vector.broadcast %5 : vector<1x128xf32> to vector<8x128xf32>
    %276 = arith.addf %274, %275 : vector<8x128xf32>
    %cst_77 = arith.constant dense<0xFF800000> : vector<8xf32>
    %277 = vector.multi_reduction <maximumf>, %276, %cst_77 [1] : vector<8x128xf32> to vector<8xf32>
    %278 = vector.shape_cast %277 : vector<8xf32> to vector<8x1xf32>
    %279 = vector.broadcast %278 : vector<8x1xf32> to vector<8x128xf32>
    %280 = arith.subf %276, %279 : vector<8x128xf32>
    %281 = math.exp %280 : vector<8x128xf32>
    %cst_78 = arith.constant dense<0.000000e+00> : vector<8xf32>
    %282 = vector.multi_reduction <add>, %281, %cst_78 [1] : vector<8x128xf32> to vector<8xf32>
    %283 = vector.shape_cast %282 : vector<8xf32> to vector<8x1xf32>
    %284 = math.log %283 : vector<8x1xf32>
    %285 = vector.broadcast %284 : vector<8x1xf32> to vector<8x128xf32>
    %286 = arith.subf %280, %285 : vector<8x128xf32>
    %287 = arith.index_cast %c3_i32 : i32 to index
    %c0_79 = arith.constant 0 : index
    %c0_80 = arith.constant 0 : index
    %288 = vector.load %arg9[%287, %c0_79, %c0_80] : memref<6x8x128xf32, #tpu.memory_space<vmem>>, vector<1x8x128xf32>
    %289 = vector.shape_cast %288 : vector<1x8x128xf32> to vector<8x128xf32>
    %290 = vector.shape_cast %286 : vector<8x128xf32> to vector<1x8x128xf32>
    tpu.vector_store %arg9[%287, %c0_79, %c0_80], %290 {strides = array<i32>} : memref<6x8x128xf32, #tpu.memory_space<vmem>>, vector<1x8x128xf32>,
    %cst_81 = arith.constant 0.000000e+00 : f32
    %291 = vector.broadcast %cst_81 : f32 to vector<8x128xf32>
    %292 = arith.cmpf oge, %280, %291 : vector<8x128xf32>
    %c128_i32_82 = arith.constant 128 : i32
    %293 = vector.broadcast %c128_i32_82 : i32 to vector<8x128xi32>
    %294 = arith.select %292, %6, %293 : vector<8x128xi1>, vector<8x128xi32>
    %cst_83 = arith.constant dense<2147483647> : vector<8xi32>
    %295 = vector.multi_reduction <minsi>, %294, %cst_83 [1] : vector<8x128xi32> to vector<8xi32>
    %296 = vector.shape_cast %295 : vector<8xi32> to vector<8x1xi32>
    %297 = vector.broadcast %296 : vector<8x1xi32> to vector<8x128xi32>
    %298 = arith.cmpi eq, %6, %297 : vector<8x128xi32>
    %299 = arith.extui %298 : vector<8x128xi1> to vector<8x128xi32>
    %300 = arith.sitofp %299 : vector<8x128xi32> to vector<8x128xf32>
    %c4_i32 = arith.constant 4 : i32
    %301 = arith.truncf %272 : vector<8x128xf32> to vector<8x128xbf16>
    %cst_84 = arith.constant dense<0.000000e+00> : vector<8x384xf32>
    %302 = tpu.matmul %301, %1, %cst_84 {dimension_numbers = #tpu.dot_dimension_numbers<[1], [0], [0], [1], [0, 0, 1, 1], [], []>} : vector<8x128xbf16>, vector<128x384xbf16>, vector<8x384xf32> -> vector<8x384xf32>
    %303 = vector.broadcast %3 : vector<1x384xf32> to vector<8x384xf32>
    %304 = arith.addf %302, %303 : vector<8x384xf32>
    %305 = arith.index_cast %c4_i32 : i32 to index
    %c0_85 = arith.constant 0 : index
    %c0_86 = arith.constant 0 : index
    %306 = vector.load %arg0[%305, %c0_85, %c0_86] : memref<6x8x1xf32, #tpu.memory_space<vmem>>, vector<1x8x1xf32>
    %307 = vector.shape_cast %306 : vector<1x8x1xf32> to vector<8x1xf32>
    %cst_87 = arith.constant 0.000000e+00 : f32
    %308 = vector.broadcast %cst_87 : f32 to vector<8x1xf32>
    %309 = arith.cmpf one, %307, %308 : vector<8x1xf32>
    %310 = arith.index_cast %c4_i32 : i32 to index
    %c0_88 = arith.constant 0 : index
    %c0_89 = arith.constant 0 : index
    %311 = vector.load %arg1[%310, %c0_88, %c0_89] : memref<6x8x128xf32, #tpu.memory_space<vmem>>, vector<1x8x128xf32>
    %312 = vector.shape_cast %311 : vector<1x8x128xf32> to vector<8x128xf32>
    %313 = vector.shape_cast %309 : vector<8x1xi1> to vector<8x1xi1>
    %314 = vector.broadcast %313 : vector<8x1xi1> to vector<8x128xi1>
    %315 = arith.select %314, %312, %300 : vector<8x128xi1>, vector<8x128xf32>
    %316 = arith.truncf %315 : vector<8x128xf32> to vector<8x128xbf16>
    %cst_90 = arith.constant dense<0.000000e+00> : vector<8x384xf32>
    %317 = tpu.matmul %316, %0, %cst_90 {dimension_numbers = #tpu.dot_dimension_numbers<[1], [0], [0], [1], [0, 0, 1, 1], [], []>} : vector<8x128xbf16>, vector<128x384xbf16>, vector<8x384xf32> -> vector<8x384xf32>
    %318 = vector.broadcast %2 : vector<1x384xf32> to vector<8x384xf32>
    %319 = arith.addf %317, %318 : vector<8x384xf32>
    %320 = vector.extract_strided_slice %319 {offsets = [0, 0], sizes = [8, 128], strides = [1, 1]} : vector<8x384xf32> to vector<8x128xf32>
    %321 = vector.extract_strided_slice %304 {offsets = [0, 0], sizes = [8, 128], strides = [1, 1]} : vector<8x384xf32> to vector<8x128xf32>
    %322 = arith.addf %320, %321 : vector<8x128xf32>
    %323 = arith.negf %322 : vector<8x128xf32>
    %324 = math.exp %323 : vector<8x128xf32>
    %cst_91 = arith.constant 1.000000e+00 : f32
    %325 = vector.broadcast %cst_91 : f32 to vector<8x128xf32>
    %326 = arith.addf %325, %324 : vector<8x128xf32>
    %327 = arith.divf %325, %326 : vector<8x128xf32>
    %328 = vector.extract_strided_slice %319 {offsets = [0, 128], sizes = [8, 128], strides = [1, 1]} : vector<8x384xf32> to vector<8x128xf32>
    %329 = vector.extract_strided_slice %304 {offsets = [0, 128], sizes = [8, 128], strides = [1, 1]} : vector<8x384xf32> to vector<8x128xf32>
    %330 = arith.addf %328, %329 : vector<8x128xf32>
    %331 = arith.negf %330 : vector<8x128xf32>
    %332 = math.exp %331 : vector<8x128xf32>
    %cst_92 = arith.constant 1.000000e+00 : f32
    %333 = vector.broadcast %cst_92 : f32 to vector<8x128xf32>
    %334 = arith.addf %333, %332 : vector<8x128xf32>
    %335 = arith.divf %333, %334 : vector<8x128xf32>
    %336 = vector.extract_strided_slice %319 {offsets = [0, 256], sizes = [8, 128], strides = [1, 1]} : vector<8x384xf32> to vector<8x128xf32>
    %337 = vector.extract_strided_slice %304 {offsets = [0, 256], sizes = [8, 128], strides = [1, 1]} : vector<8x384xf32> to vector<8x128xf32>
    %338 = arith.mulf %327, %337 : vector<8x128xf32>
    %339 = arith.addf %336, %338 : vector<8x128xf32>
    %340 = math.tanh %339 : vector<8x128xf32>
    %cst_93 = arith.constant 1.000000e+00 : f32
    %341 = vector.broadcast %cst_93 : f32 to vector<8x128xf32>
    %342 = arith.subf %341, %335 : vector<8x128xf32>
    %343 = arith.mulf %342, %340 : vector<8x128xf32>
    %344 = arith.mulf %335, %272 : vector<8x128xf32>
    %345 = arith.addf %343, %344 : vector<8x128xf32>
    %346 = arith.truncf %345 : vector<8x128xf32> to vector<8x128xbf16>
    %cst_94 = arith.constant dense<0.000000e+00> : vector<8x128xf32>
    %347 = tpu.matmul %346, %4, %cst_94 {dimension_numbers = #tpu.dot_dimension_numbers<[1], [0], [0], [1], [0, 0, 1, 1], [], []>} : vector<8x128xbf16>, vector<128x128xbf16>, vector<8x128xf32> -> vector<8x128xf32>
    %348 = vector.broadcast %5 : vector<1x128xf32> to vector<8x128xf32>
    %349 = arith.addf %347, %348 : vector<8x128xf32>
    %cst_95 = arith.constant dense<0xFF800000> : vector<8xf32>
    %350 = vector.multi_reduction <maximumf>, %349, %cst_95 [1] : vector<8x128xf32> to vector<8xf32>
    %351 = vector.shape_cast %350 : vector<8xf32> to vector<8x1xf32>
    %352 = vector.broadcast %351 : vector<8x1xf32> to vector<8x128xf32>
    %353 = arith.subf %349, %352 : vector<8x128xf32>
    %354 = math.exp %353 : vector<8x128xf32>
    %cst_96 = arith.constant dense<0.000000e+00> : vector<8xf32>
    %355 = vector.multi_reduction <add>, %354, %cst_96 [1] : vector<8x128xf32> to vector<8xf32>
    %356 = vector.shape_cast %355 : vector<8xf32> to vector<8x1xf32>
    %357 = math.log %356 : vector<8x1xf32>
    %358 = vector.broadcast %357 : vector<8x1xf32> to vector<8x128xf32>
    %359 = arith.subf %353, %358 : vector<8x128xf32>
    %360 = arith.index_cast %c4_i32 : i32 to index
    %c0_97 = arith.constant 0 : index
    %c0_98 = arith.constant 0 : index
    %361 = vector.load %arg9[%360, %c0_97, %c0_98] : memref<6x8x128xf32, #tpu.memory_space<vmem>>, vector<1x8x128xf32>
    %362 = vector.shape_cast %361 : vector<1x8x128xf32> to vector<8x128xf32>
    %363 = vector.shape_cast %359 : vector<8x128xf32> to vector<1x8x128xf32>
    tpu.vector_store %arg9[%360, %c0_97, %c0_98], %363 {strides = array<i32>} : memref<6x8x128xf32, #tpu.memory_space<vmem>>, vector<1x8x128xf32>,
    %cst_99 = arith.constant 0.000000e+00 : f32
    %364 = vector.broadcast %cst_99 : f32 to vector<8x128xf32>
    %365 = arith.cmpf oge, %353, %364 : vector<8x128xf32>
    %c128_i32_100 = arith.constant 128 : i32
    %366 = vector.broadcast %c128_i32_100 : i32 to vector<8x128xi32>
    %367 = arith.select %365, %6, %366 : vector<8x128xi1>, vector<8x128xi32>
    %cst_101 = arith.constant dense<2147483647> : vector<8xi32>
    %368 = vector.multi_reduction <minsi>, %367, %cst_101 [1] : vector<8x128xi32> to vector<8xi32>
    %369 = vector.shape_cast %368 : vector<8xi32> to vector<8x1xi32>
    %370 = vector.broadcast %369 : vector<8x1xi32> to vector<8x128xi32>
    %371 = arith.cmpi eq, %6, %370 : vector<8x128xi32>
    %372 = arith.extui %371 : vector<8x128xi1> to vector<8x128xi32>
    %373 = arith.sitofp %372 : vector<8x128xi32> to vector<8x128xf32>
    %c5_i32 = arith.constant 5 : i32
    %374 = arith.truncf %345 : vector<8x128xf32> to vector<8x128xbf16>
    %cst_102 = arith.constant dense<0.000000e+00> : vector<8x384xf32>
    %375 = tpu.matmul %374, %1, %cst_102 {dimension_numbers = #tpu.dot_dimension_numbers<[1], [0], [0], [1], [0, 0, 1, 1], [], []>} : vector<8x128xbf16>, vector<128x384xbf16>, vector<8x384xf32> -> vector<8x384xf32>
    %376 = vector.broadcast %3 : vector<1x384xf32> to vector<8x384xf32>
    %377 = arith.addf %375, %376 : vector<8x384xf32>
    %378 = arith.index_cast %c5_i32 : i32 to index
    %c0_103 = arith.constant 0 : index
    %c0_104 = arith.constant 0 : index
    %379 = vector.load %arg0[%378, %c0_103, %c0_104] : memref<6x8x1xf32, #tpu.memory_space<vmem>>, vector<1x8x1xf32>
    %380 = vector.shape_cast %379 : vector<1x8x1xf32> to vector<8x1xf32>
    %cst_105 = arith.constant 0.000000e+00 : f32
    %381 = vector.broadcast %cst_105 : f32 to vector<8x1xf32>
    %382 = arith.cmpf one, %380, %381 : vector<8x1xf32>
    %383 = arith.index_cast %c5_i32 : i32 to index
    %c0_106 = arith.constant 0 : index
    %c0_107 = arith.constant 0 : index
    %384 = vector.load %arg1[%383, %c0_106, %c0_107] : memref<6x8x128xf32, #tpu.memory_space<vmem>>, vector<1x8x128xf32>
    %385 = vector.shape_cast %384 : vector<1x8x128xf32> to vector<8x128xf32>
    %386 = vector.shape_cast %382 : vector<8x1xi1> to vector<8x1xi1>
    %387 = vector.broadcast %386 : vector<8x1xi1> to vector<8x128xi1>
    %388 = arith.select %387, %385, %373 : vector<8x128xi1>, vector<8x128xf32>
    %389 = arith.truncf %388 : vector<8x128xf32> to vector<8x128xbf16>
    %cst_108 = arith.constant dense<0.000000e+00> : vector<8x384xf32>
    %390 = tpu.matmul %389, %0, %cst_108 {dimension_numbers = #tpu.dot_dimension_numbers<[1], [0], [0], [1], [0, 0, 1, 1], [], []>} : vector<8x128xbf16>, vector<128x384xbf16>, vector<8x384xf32> -> vector<8x384xf32>
    %391 = vector.broadcast %2 : vector<1x384xf32> to vector<8x384xf32>
    %392 = arith.addf %390, %391 : vector<8x384xf32>
    %393 = vector.extract_strided_slice %392 {offsets = [0, 0], sizes = [8, 128], strides = [1, 1]} : vector<8x384xf32> to vector<8x128xf32>
    %394 = vector.extract_strided_slice %377 {offsets = [0, 0], sizes = [8, 128], strides = [1, 1]} : vector<8x384xf32> to vector<8x128xf32>
    %395 = arith.addf %393, %394 : vector<8x128xf32>
    %396 = arith.negf %395 : vector<8x128xf32>
    %397 = math.exp %396 : vector<8x128xf32>
    %cst_109 = arith.constant 1.000000e+00 : f32
    %398 = vector.broadcast %cst_109 : f32 to vector<8x128xf32>
    %399 = arith.addf %398, %397 : vector<8x128xf32>
    %400 = arith.divf %398, %399 : vector<8x128xf32>
    %401 = vector.extract_strided_slice %392 {offsets = [0, 128], sizes = [8, 128], strides = [1, 1]} : vector<8x384xf32> to vector<8x128xf32>
    %402 = vector.extract_strided_slice %377 {offsets = [0, 128], sizes = [8, 128], strides = [1, 1]} : vector<8x384xf32> to vector<8x128xf32>
    %403 = arith.addf %401, %402 : vector<8x128xf32>
    %404 = arith.negf %403 : vector<8x128xf32>
    %405 = math.exp %404 : vector<8x128xf32>
    %cst_110 = arith.constant 1.000000e+00 : f32
    %406 = vector.broadcast %cst_110 : f32 to vector<8x128xf32>
    %407 = arith.addf %406, %405 : vector<8x128xf32>
    %408 = arith.divf %406, %407 : vector<8x128xf32>
    %409 = vector.extract_strided_slice %392 {offsets = [0, 256], sizes = [8, 128], strides = [1, 1]} : vector<8x384xf32> to vector<8x128xf32>
    %410 = vector.extract_strided_slice %377 {offsets = [0, 256], sizes = [8, 128], strides = [1, 1]} : vector<8x384xf32> to vector<8x128xf32>
    %411 = arith.mulf %400, %410 : vector<8x128xf32>
    %412 = arith.addf %409, %411 : vector<8x128xf32>
    %413 = math.tanh %412 : vector<8x128xf32>
    %cst_111 = arith.constant 1.000000e+00 : f32
    %414 = vector.broadcast %cst_111 : f32 to vector<8x128xf32>
    %415 = arith.subf %414, %408 : vector<8x128xf32>
    %416 = arith.mulf %415, %413 : vector<8x128xf32>
    %417 = arith.mulf %408, %345 : vector<8x128xf32>
    %418 = arith.addf %416, %417 : vector<8x128xf32>
    %419 = arith.truncf %418 : vector<8x128xf32> to vector<8x128xbf16>
    %cst_112 = arith.constant dense<0.000000e+00> : vector<8x128xf32>
    %420 = tpu.matmul %419, %4, %cst_112 {dimension_numbers = #tpu.dot_dimension_numbers<[1], [0], [0], [1], [0, 0, 1, 1], [], []>} : vector<8x128xbf16>, vector<128x128xbf16>, vector<8x128xf32> -> vector<8x128xf32>
    %421 = vector.broadcast %5 : vector<1x128xf32> to vector<8x128xf32>
    %422 = arith.addf %420, %421 : vector<8x128xf32>
    %cst_113 = arith.constant dense<0xFF800000> : vector<8xf32>
    %423 = vector.multi_reduction <maximumf>, %422, %cst_113 [1] : vector<8x128xf32> to vector<8xf32>
    %424 = vector.shape_cast %423 : vector<8xf32> to vector<8x1xf32>
    %425 = vector.broadcast %424 : vector<8x1xf32> to vector<8x128xf32>
    %426 = arith.subf %422, %425 : vector<8x128xf32>
    %427 = math.exp %426 : vector<8x128xf32>
    %cst_114 = arith.constant dense<0.000000e+00> : vector<8xf32>
    %428 = vector.multi_reduction <add>, %427, %cst_114 [1] : vector<8x128xf32> to vector<8xf32>
    %429 = vector.shape_cast %428 : vector<8xf32> to vector<8x1xf32>
    %430 = math.log %429 : vector<8x1xf32>
    %431 = vector.broadcast %430 : vector<8x1xf32> to vector<8x128xf32>
    %432 = arith.subf %426, %431 : vector<8x128xf32>
    %433 = arith.index_cast %c5_i32 : i32 to index
    %c0_115 = arith.constant 0 : index
    %c0_116 = arith.constant 0 : index
    %434 = vector.load %arg9[%433, %c0_115, %c0_116] : memref<6x8x128xf32, #tpu.memory_space<vmem>>, vector<1x8x128xf32>
    %435 = vector.shape_cast %434 : vector<1x8x128xf32> to vector<8x128xf32>
    %436 = vector.shape_cast %432 : vector<8x128xf32> to vector<1x8x128xf32>
    tpu.vector_store %arg9[%433, %c0_115, %c0_116], %436 {strides = array<i32>} : memref<6x8x128xf32, #tpu.memory_space<vmem>>, vector<1x8x128xf32>,
    %cst_117 = arith.constant 0.000000e+00 : f32
    %437 = vector.broadcast %cst_117 : f32 to vector<8x128xf32>
    %438 = arith.cmpf oge, %426, %437 : vector<8x128xf32>
    %c128_i32_118 = arith.constant 128 : i32
    %439 = vector.broadcast %c128_i32_118 : i32 to vector<8x128xi32>
    %440 = arith.select %438, %6, %439 : vector<8x128xi1>, vector<8x128xi32>
    %cst_119 = arith.constant dense<2147483647> : vector<8xi32>
    %441 = vector.multi_reduction <minsi>, %440, %cst_119 [1] : vector<8x128xi32> to vector<8xi32>
    %442 = vector.shape_cast %441 : vector<8xi32> to vector<8x1xi32>
    %443 = vector.broadcast %442 : vector<8x1xi32> to vector<8x128xi32>
    %444 = arith.cmpi eq, %6, %443 : vector<8x128xi32>
    %445 = arith.extui %444 : vector<8x128xi1> to vector<8x128xi32>
    %446 = arith.sitofp %445 : vector<8x128xi32> to vector<8x128xf32>
    %c6_i32 = arith.constant 6 : i32
    return
  }
}

</mosaic_0001>

<llo_original>
// kernel: tpu_custom_call.1
$region0: #{tpu_custom_call.1}
  #allocation0 [shape = 'u32[]', space=smem, size = 0x4, offset = 0x4, fixed_abs, tag = 'smem constant byte address 0x4 - core index']
  #allocation1 [shape = 'u32[144,128]{1,0:T(1,128)}', space=vmem, size = 0x12000, scoped, tag = 'internal scratch']
  %s0 = inlined_call_operand.vmem [shape: f32[6,8,1], index: 0, kind: input, shape index: {}]
  %s1 = inlined_call_operand.hbm [shape: f32[6,8,128], index: 1, kind: input, shape index: {}]
  %s2 = inlined_call_operand.vmem [shape: f32[8,128], index: 2, kind: input, shape index: {}]
  %s3 = inlined_call_operand.hbm [shape: bf16[128,384], index: 3, kind: input, shape index: {}]
  %s4 = inlined_call_operand.hbm [shape: bf16[128,384], index: 4, kind: input, shape index: {}]
  %s5 = inlined_call_operand.vmem [shape: f32[1,384], index: 5, kind: input, shape index: {}]
  %s6 = inlined_call_operand.vmem [shape: f32[1,384], index: 6, kind: input, shape index: {}]
  %s7 = inlined_call_operand.vmem [shape: bf16[128,128], index: 7, kind: input, shape index: {}]
  %s8 = inlined_call_operand.vmem [shape: f32[1,128], index: 8, kind: input, shape index: {}]
  %s9 = inlined_call_operand.hbm [shape: f32[6,8,128], index: 9, kind: output, shape index: {}]
  %s10 = sld [smem:[#allocation0]]
  $region58: #{tpu_custom_call.1} parent=0
    _
  %s12 = ssub.s32 1, %s10
  %s13 = scalar_select 0, %s12, %s10
  $region1: #{tpu_custom_call.1} parent=0
    #allocation2 [shape = 'u8[24576]{0}', space=vmem, size = 0x6000, scoped, tag = 'input window, operand 1, single buffered']
    #allocation3 [shape = 's32[1]{0}', space=sflag, size = 0x4, scoped, tag = 'scoped memory for tpu_custom_call.1']
    #allocation4 [shape = 's32[1]{0}', space=sflag, size = 0x4, scoped, tag = 'scoped memory for tpu_custom_call.1']
    #allocation5 [shape = 'u8[98304]{0}', space=vmem, size = 0x18000, scoped, tag = 'input window, operand 3, single buffered']
    #allocation6 [shape = 's32[1]{0}', space=sflag, size = 0x4, scoped, tag = 'scoped memory for tpu_custom_call.1']
    #allocation7 [shape = 'u8[98304]{0}', space=vmem, size = 0x18000, scoped, tag = 'input window, operand 4, single buffered']
    #allocation8 [shape = 'u8[24576]{0}', space=vmem, size = 0x6000, scoped, tag = 'output window, operand 0, single buffered']
    %14 = vsyncpa [#allocation3], 0
    %15 = vsyncpa [#allocation6], 0
    %16 = vsyncpa [#allocation4], 0
    // Predicated region
    $region2: #{tpu_custom_call.1} parent=1 // pred_check
      _
    $region3: #{tpu_custom_call.1} parent=1 // pred_check_branch
      %18 = sbr.rel (0) target = $region5
    $region4: #{tpu_custom_call.1} parent=1 // pred_region
      _
    $region5: #{tpu_custom_call.1} parent=1 // pred_fallthru
      _
    // Predicated region
    $region6: #{tpu_custom_call.1} parent=1 // pred_check
      _
    $region7: #{tpu_custom_call.1} parent=1 // pred_check_branch
      %20 = sbr.rel (0) target = $region9
    $region8: #{tpu_custom_call.1} parent=1 // pred_region
      %s22 = ssub.s32 768, 768
      %23 = vsyncadd [#allocation3], %s22
      %s24 = sshll.u32 [#allocation2], 4
      %s25 = int_to_ptr.vmem [resolvable:$true] %s24
      %30 = dma.hbm_to_vmem [thread:$0]  %s1, 768, %s25, [#allocation3], 128, 128, 8
    $region9: #{tpu_custom_call.1} parent=1 // pred_fallthru
      _
    // Predicated region
    $region10: #{tpu_custom_call.1} parent=1 // pred_check
      _
    $region11: #{tpu_custom_call.1} parent=1 // pred_check_branch
      %32 = sbr.rel (0) target = $region13
    $region12: #{tpu_custom_call.1} parent=1 // pred_region
      _
    $region13: #{tpu_custom_call.1} parent=1 // pred_fallthru
      _
    // Predicated region
    $region14: #{tpu_custom_call.1} parent=1 // pred_check
      _
    $region15: #{tpu_custom_call.1} parent=1 // pred_check_branch
      %34 = sbr.rel (0) target = $region17
    $region16: #{tpu_custom_call.1} parent=1 // pred_region
      %s36 = ssub.s32 3072, 3072
      %37 = vsyncadd [#allocation6], %s36
      %s38 = sshll.u32 [#allocation5], 4
      %s39 = int_to_ptr.vmem [resolvable:$true] %s38
      %44 = dma.hbm_to_vmem [thread:$0]  %s3, 3072, %s39, [#allocation6], 192, 192, 12
    $region17: #{tpu_custom_call.1} parent=1 // pred_fallthru
      _
    // Predicated region
    $region18: #{tpu_custom_call.1} parent=1 // pred_check
      _
    $region19: #{tpu_custom_call.1} parent=1 // pred_check_branch
      %46 = sbr.rel (0) target = $region21
    $region20: #{tpu_custom_call.1} parent=1 // pred_region
      %s48 = ssub.s32 3072, 3072
      %49 = vsyncadd [#allocation6], %s48
      %s50 = sshll.u32 [#allocation7], 4
      %s51 = int_to_ptr.vmem [resolvable:$true] %s50
      %56 = dma.hbm_to_vmem [thread:$0]  %s4, 3072, %s51, [#allocation6], 192, 192, 12
    $region21: #{tpu_custom_call.1} parent=1 // pred_fallthru
      _
    // Predicated region
    $region22: #{tpu_custom_call.1} parent=1 // pred_check
      _
    $region23: #{tpu_custom_call.1} parent=1 // pred_check_branch
      %58 = sbr.rel (0) target = $region25
    $region24: #{tpu_custom_call.1} parent=1 // pred_region
      _
    $region25: #{tpu_custom_call.1} parent=1 // pred_fallthru
      _
    // Predicated region
    $region26: #{tpu_custom_call.1} parent=1 // pred_check
      _
    $region27: #{tpu_custom_call.1} parent=1 // pred_check_branch
      %60 = sbr.rel (0) target = $region29
    $region28: #{tpu_custom_call.1} parent=1 // pred_region
      _
    $region29: #{tpu_custom_call.1} parent=1 // pred_fallthru
      _
    // Predicated region
    $region30: #{tpu_custom_call.1} parent=1 // pred_check
      _
    $region31: #{tpu_custom_call.1} parent=1 // pred_check_branch
      %62 = sbr.rel (0) target = $region33
    $region32: #{tpu_custom_call.1} parent=1 // pred_region
      _
    $region33: #{tpu_custom_call.1} parent=1 // pred_fallthru
      _
    // Predicated region
    $region34: #{tpu_custom_call.1} parent=1 // pred_check
      _
    $region35: #{tpu_custom_call.1} parent=1 // pred_check_branch
      %64 = sbr.rel (0) target = $region37
    $region36: #{tpu_custom_call.1} parent=1 // pred_region
      _
    $region37: #{tpu_custom_call.1} parent=1 // pred_fallthru
      _
    // Predicated region
    $region38: #{tpu_custom_call.1} parent=1 // pred_check
      _
    $region39: #{tpu_custom_call.1} parent=1 // pred_check_branch
      %66 = sbr.rel (0) target = $region41
    $region40: #{tpu_custom_call.1} parent=1 // pred_region
      %67 = dma.done [#allocation3], 768
    $region41: #{tpu_custom_call.1} parent=1 // pred_fallthru
      _
    // Predicated region
    $region42: #{tpu_custom_call.1} parent=1 // pred_check
      _
    $region43: #{tpu_custom_call.1} parent=1 // pred_check_branch
      %69 = sbr.rel (0) target = $region45
    $region44: #{tpu_custom_call.1} parent=1 // pred_region
      %70 = dma.done [#allocation6], 3072
    $region45: #{tpu_custom_call.1} parent=1 // pred_fallthru
      _
    // Predicated region
    $region46: #{tpu_custom_call.1} parent=1 // pred_check
      _
    $region47: #{tpu_custom_call.1} parent=1 // pred_check_branch
      %72 = sbr.rel (0) target = $region49
    $region48: #{tpu_custom_call.1} parent=1 // pred_region
      %73 = dma.done [#allocation6], 3072
    $region49: #{tpu_custom_call.1} parent=1 // pred_fallthru
      _
    %v75 = vld [vmem:[#allocation5] sm:$0xff]
    %v76 = vld [vmem:[#allocation5 + $0x8] sm:$0xf]
    %v77 = vld [vmem:[#allocation5 + $0xc] sm:$0xff]
    %v78 = vld [vmem:[#allocation5 + $0x14] sm:$0xf]
    %v79 = vld [vmem:[#allocation5 + $0x18] sm:$0xff]
    %v80 = vld [vmem:[#allocation5 + $0x20] sm:$0xf]
    %v81 = vld [vmem:[#allocation5 + $0x24] sm:$0xff]
    %v82 = vld [vmem:[#allocation5 + $0x2c] sm:$0xf]
    %v83 = vld [vmem:[#allocation5 + $0x30] sm:$0xff]
    %v84 = vld [vmem:[#allocation5 + $0x38] sm:$0xf]
    %v85 = vld [vmem:[#allocation5 + $0x3c] sm:$0xff]
    %v86 = vld [vmem:[#allocation5 + $0x44] sm:$0xf]
    %v87 = vld [vmem:[#allocation5 + $0x48] sm:$0xff]
    %v88 = vld [vmem:[#allocation5 + $0x50] sm:$0xf]
    %v89 = vld [vmem:[#allocation5 + $0x54] sm:$0xff]
    %v90 = vld [vmem:[#allocation5 + $0x5c] sm:$0xf]
    %v91 = vld [vmem:[#allocation5 + $0x60] sm:$0xff]
    %v92 = vld [vmem:[#allocation5 + $0x68] sm:$0xf]
    %v93 = vld [vmem:[#allocation5 + $0x6c] sm:$0xff]
    %v94 = vld [vmem:[#allocation5 + $0x74] sm:$0xf]
    %v95 = vld [vmem:[#allocation5 + $0x78] sm:$0xff]
    %v96 = vld [vmem:[#allocation5 + $0x80] sm:$0xf]
    %v97 = vld [vmem:[#allocation5 + $0x84] sm:$0xff]
    %v98 = vld [vmem:[#allocation5 + $0x8c] sm:$0xf]
    %v99 = vld [vmem:[#allocation5 + $0x90] sm:$0xff]
    %v100 = vld [vmem:[#allocation5 + $0x98] sm:$0xf]
    %v101 = vld [vmem:[#allocation5 + $0x9c] sm:$0xff]
    %v102 = vld [vmem:[#allocation5 + $0xa4] sm:$0xf]
    %v103 = vld [vmem:[#allocation5 + $0xa8] sm:$0xff]
    %v104 = vld [vmem:[#allocation5 + $0xb0] sm:$0xf]
    %v105 = vld [vmem:[#allocation5 + $0xb4] sm:$0xff]
    %v106 = vld [vmem:[#allocation5 + $0xbc] sm:$0xf]
    %v107 = vld [vmem:[#allocation7] sm:$0xff]
    %v108 = vld [vmem:[#allocation7 + $0x8] sm:$0xf]
    %v109 = vld [vmem:[#allocation7 + $0xc] sm:$0xff]
    %v110 = vld [vmem:[#allocation7 + $0x14] sm:$0xf]
    %v111 = vld [vmem:[#allocation7 + $0x18] sm:$0xff]
    %v112 = vld [vmem:[#allocation7 + $0x20] sm:$0xf]
    %v113 = vld [vmem:[#allocation7 + $0x24] sm:$0xff]
    %v114 = vld [vmem:[#allocation7 + $0x2c] sm:$0xf]
    %v115 = vld [vmem:[#allocation7 + $0x30] sm:$0xff]
    %v116 = vld [vmem:[#allocation7 + $0x38] sm:$0xf]
    %v117 = vld [vmem:[#allocation7 + $0x3c] sm:$0xff]
    %v118 = vld [vmem:[#allocation7 + $0x44] sm:$0xf]
    %v119 = vld [vmem:[#allocation7 + $0x48] sm:$0xff]
    %v120 = vld [vmem:[#allocation7 + $0x50] sm:$0xf]
    %v121 = vld [vmem:[#allocation7 + $0x54] sm:$0xff]
    %v122 = vld [vmem:[#allocation7 + $0x5c] sm:$0xf]
    %v123 = vld [vmem:[#allocation7 + $0x60] sm:$0xff]
    %v124 = vld [vmem:[#allocation7 + $0x68] sm:$0xf]
    %v125 = vld [vmem:[#allocation7 + $0x6c] sm:$0xff]
    %v126 = vld [vmem:[#allocation7 + $0x74] sm:$0xf]
    %v127 = vld [vmem:[#allocation7 + $0x78] sm:$0xff]
    %v128 = vld [vmem:[#allocation7 + $0x80] sm:$0xf]
    %v129 = vld [vmem:[#allocation7 + $0x84] sm:$0xff]
    %v130 = vld [vmem:[#allocation7 + $0x8c] sm:$0xf]
    %v131 = vld [vmem:[#allocation7 + $0x90] sm:$0xff]
    %v132 = vld [vmem:[#allocation7 + $0x98] sm:$0xf]
    %v133 = vld [vmem:[#allocation7 + $0x9c] sm:$0xff]
    %v134 = vld [vmem:[#allocation7 + $0xa4] sm:$0xf]
    %v135 = vld [vmem:[#allocation7 + $0xa8] sm:$0xff]
    %v136 = vld [vmem:[#allocation7 + $0xb0] sm:$0xf]
    %v137 = vld [vmem:[#allocation7 + $0xb4] sm:$0xff]
    %v138 = vld [vmem:[#allocation7 + $0xbc] sm:$0xf]
    %v139 = vld [vmem:[%s5] sm:$0x7]
    %v140 = vld [vmem:[%s6] sm:$0x7]
    %v141 = vld [vmem:[%s7] sm:$0xf]
    %v142 = vld [vmem:[%s7 + $0x4] sm:$0xf]
    %v143 = vld [vmem:[%s7 + $0x8] sm:$0xf]
    %v144 = vld [vmem:[%s7 + $0xc] sm:$0xf]
    %v145 = vld [vmem:[%s7 + $0x10] sm:$0xf]
    %v146 = vld [vmem:[%s7 + $0x14] sm:$0xf]
    %v147 = vld [vmem:[%s7 + $0x18] sm:$0xf]
    %v148 = vld [vmem:[%s7 + $0x1c] sm:$0xf]
    %v149 = vld [vmem:[%s7 + $0x20] sm:$0xf]
    %v150 = vld [vmem:[%s7 + $0x24] sm:$0xf]
    %v151 = vld [vmem:[%s7 + $0x28] sm:$0xf]
    %v152 = vld [vmem:[%s7 + $0x2c] sm:$0xf]
    %v153 = vld [vmem:[%s7 + $0x30] sm:$0xf]
    %v154 = vld [vmem:[%s7 + $0x34] sm:$0xf]
    %v155 = vld [vmem:[%s7 + $0x38] sm:$0xf]
    %v156 = vld [vmem:[%s7 + $0x3c] sm:$0xf]
    %v157 = vld [vmem:[%s8] sm:$0x1]
    %v158 = vlaneseq
    %v159 = vand.u32 %v158, 127
    %v160 = vld [vmem:[%s2] sm:$0xff]
    %v161 = vpack.c.bf16 %v160, %v160
    %v163 = vlaneseq
    %v164 = vshrl.u32 %v163, 7
    %v165 = vsub.s32 0, %v164
    %v166 = vrot.slane %v140, %v165
    %v167 = vlaneseq
    %v168 = vshrl.u32 %v167, 7
    %v169 = vsub.s32 1, %v168
    %v170 = vrot.slane %v140, %v169
    %v171 = vlaneseq
    %v172 = vshrl.u32 %v171, 7
    %v173 = vsub.s32 2, %v172
    %v174 = vrot.slane %v140, %v173
    %v210 = vunpack.c.l.b16 %v107
    %v211 = vunpack.c.h.b16 %v107
    %v212 = vunpack.c.l.b16 %v108
    %v213 = vunpack.c.l.b16 %v109
    %v214 = vunpack.c.h.b16 %v109
    %v215 = vunpack.c.l.b16 %v110
    %v216 = vunpack.c.l.b16 %v111
    %v217 = vunpack.c.h.b16 %v111
    %v218 = vunpack.c.l.b16 %v112
    %v219 = vunpack.c.l.b16 %v113
    %v220 = vunpack.c.h.b16 %v113
    %v221 = vunpack.c.l.b16 %v114
    %v222 = vunpack.c.l.b16 %v115
    %v223 = vunpack.c.h.b16 %v115
    %v224 = vunpack.c.l.b16 %v116
    %v225 = vunpack.c.l.b16 %v117
    %v226 = vunpack.c.h.b16 %v117
    %v227 = vunpack.c.l.b16 %v118
    %v228 = vunpack.c.l.b16 %v119
    %v229 = vunpack.c.h.b16 %v119
    %v230 = vunpack.c.l.b16 %v120
    %v231 = vunpack.c.l.b16 %v121
    %v232 = vunpack.c.h.b16 %v121
    %v233 = vunpack.c.l.b16 %v122
    %v234 = vunpack.c.l.b16 %v123
    %v235 = vunpack.c.h.b16 %v123
    %v236 = vunpack.c.l.b16 %v124
    %v237 = vunpack.c.l.b16 %v125
    %v238 = vunpack.c.h.b16 %v125
    %v239 = vunpack.c.l.b16 %v126
    %v240 = vunpack.c.l.b16 %v127
    %v241 = vunpack.c.h.b16 %v127
    %v242 = vunpack.c.l.b16 %v128
    %v243 = vunpack.c.l.b16 %v129
    %v244 = vunpack.c.h.b16 %v129
    %v245 = vunpack.c.l.b16 %v130
    %v246 = vunpack.c.l.b16 %v131
    %v247 = vunpack.c.h.b16 %v131
    %v248 = vunpack.c.l.b16 %v132
    %v249 = vunpack.c.l.b16 %v133
    %v250 = vunpack.c.h.b16 %v133
    %v251 = vunpack.c.l.b16 %v134
    %v252 = vunpack.c.l.b16 %v135
    %v253 = vunpack.c.h.b16 %v135
    %v254 = vunpack.c.l.b16 %v136
    %v255 = vunpack.c.l.b16 %v137
    %v256 = vunpack.c.h.b16 %v137
    %v257 = vunpack.c.l.b16 %v138
    %v258 = vpack.c.b16 %v213, %v210
    %v259 = vpack.c.b16 %v214, %v211
    %v260 = vpack.c.b16 %v215, %v212
    %v261 = vpack.c.b16 %v219, %v216
    %v262 = vpack.c.b16 %v220, %v217
    %v263 = vpack.c.b16 %v221, %v218
    %v264 = vpack.c.b16 %v225, %v222
    %v265 = vpack.c.b16 %v226, %v223
    %v266 = vpack.c.b16 %v227, %v224
    %v267 = vpack.c.b16 %v231, %v228
    %v268 = vpack.c.b16 %v232, %v229
    %v269 = vpack.c.b16 %v233, %v230
    %v270 = vpack.c.b16 %v237, %v234
    %v271 = vpack.c.b16 %v238, %v235
    %v272 = vpack.c.b16 %v239, %v236
    %v273 = vpack.c.b16 %v243, %v240
    %v274 = vpack.c.b16 %v244, %v241
    %v275 = vpack.c.b16 %v245, %v242
    %v276 = vpack.c.b16 %v249, %v246
    %v277 = vpack.c.b16 %v250, %v247
    %v278 = vpack.c.b16 %v251, %v248
    %v279 = vpack.c.b16 %v255, %v252
    %v280 = vpack.c.b16 %v256, %v253
    %v281 = vpack.c.b16 %v257, %v254
    %306 = vmatprep.subr.bf16.mxu0 %v259
    %307 = vmatpush1.bf16.msra.mxu0 %v258
    %308 = vmatprep.subr.bf16.mxu0 %v262
    %309 = vmatpush1.bf16.msra.mxu0 %v261
    %310 = vmatprep.subr.bf16.mxu0 %v265
    %311 = vmatpush1.bf16.msra.mxu0 %v264
    %312 = vmatprep.subr.bf16.mxu0 %v268
    %313 = vmatpush1.bf16.msra.mxu0 %v267
    %314 = vmatprep.subr.bf16.mxu0 %v271
    %315 = vmatpush1.bf16.msra.mxu0 %v270
    %316 = vmatprep.subr.bf16.mxu0 %v274
    %317 = vmatpush1.bf16.msra.mxu0 %v273
    %318 = vmatprep.subr.bf16.mxu0 %v277
    %319 = vmatpush1.bf16.msra.mxu0 %v276
    %320 = vmatprep.subr.bf16.mxu0 %v280
    %321 = vmatpush1.bf16.msra.mxu0 %v279
    %322 = vmatprep.subr.bf16.mxu0 0
    %323 = vmatpush1.bf16.msra.mxu0 0
    %324 = vmatprep.subr.bf16.mxu0 0
    %325 = vmatpush1.bf16.msra.mxu0 0
    %326 = vmatprep.subr.bf16.mxu0 0
    %327 = vmatpush1.bf16.msra.mxu0 0
    %328 = vmatprep.subr.bf16.mxu0 0
    %329 = vmatpush1.bf16.msra.mxu0 0
    %330 = vmatprep.subr.bf16.mxu0 0
    %331 = vmatpush1.bf16.msra.mxu0 0
    %332 = vmatprep.subr.bf16.mxu0 0
    %333 = vmatpush1.bf16.msra.mxu0 0
    %334 = vmatprep.subr.bf16.mxu0 0
    %335 = vmatpush1.bf16.msra.mxu0 0
    %336 = vmatprep.subr.bf16.mxu0 0
    %337 = vmatpush1.bf16.msra.mxu0 0
    %338 = vmatprep.mubr.bf16.mxu0 0
    %339 = vmatmul.mubr.bf16.gmra.mrb[0].mxu0 %v161
    %v340 = vpop.f32.mrb[0].mxu0
    %v341 = vadd.f32 %v166, %v340
    %v342 = vpop.f32.mrb[0].mxu0
    %v343 = vadd.f32 %v170, %v342
    %v344 = vpop.f32.mrb[0].mxu0
    %v345 = vpop.f32.mrb[0].mxu0
    %346 = vdwg.mxu0
    %347 = vmatprep.subr.bf16.mxu0 0
    %348 = vmatpush1.bf16.msra.mxu0 %v260
    %349 = vmatprep.subr.bf16.mxu0 0
    %350 = vmatpush1.bf16.msra.mxu0 %v263
    %351 = vmatprep.subr.bf16.mxu0 0
    %352 = vmatpush1.bf16.msra.mxu0 %v266
    %353 = vmatprep.subr.bf16.mxu0 0
    %354 = vmatpush1.bf16.msra.mxu0 %v269
    %355 = vmatprep.subr.bf16.mxu0 0
    %356 = vmatpush1.bf16.msra.mxu0 %v272
    %357 = vmatprep.subr.bf16.mxu0 0
    %358 = vmatpush1.bf16.msra.mxu0 %v275
    %359 = vmatprep.subr.bf16.mxu0 0
    %360 = vmatpush1.bf16.msra.mxu0 %v278
    %361 = vmatprep.subr.bf16.mxu0 0
    %362 = vmatpush1.bf16.msra.mxu0 %v281
    %363 = vmatprep.subr.bf16.mxu0 0
    %364 = vmatpush1.bf16.msra.mxu0 0
    %365 = vmatprep.subr.bf16.mxu0 0
    %366 = vmatpush1.bf16.msra.mxu0 0
    %367 = vmatprep.subr.bf16.mxu0 0
    %368 = vmatpush1.bf16.msra.mxu0 0
    %369 = vmatprep.subr.bf16.mxu0 0
    %370 = vmatpush1.bf16.msra.mxu0 0
    %371 = vmatprep.subr.bf16.mxu0 0
    %372 = vmatpush1.bf16.msra.mxu0 0
    %373 = vmatprep.subr.bf16.mxu0 0
    %374 = vmatpush1.bf16.msra.mxu0 0
    %375 = vmatprep.subr.bf16.mxu0 0
    %376 = vmatpush1.bf16.msra.mxu0 0
    %377 = vmatprep.subr.bf16.mxu0 0
    %378 = vmatpush1.bf16.msra.mxu0 0
    %379 = vmatprep.mubr.bf16.mxu0 0
    %380 = vmatmul.mubr.bf16.gmra.mrb[0].mxu0 %v161
    %v381 = vpop.f32.mrb[0].mxu0
    %v382 = vadd.f32 %v174, %v381
    %v383 = vpop.f32.mrb[0].mxu0
    %v384 = vpop.f32.mrb[0].mxu0
    %v385 = vpop.f32.mrb[0].mxu0
    %386 = vdwg.mxu0
    %v387 = vld [vmem:[%s0] sm:$0xff]
    %vm388 = vcmp.ne.f32.partialorder %v387, 0.0
    %v389 = vld [vmem:[#allocation2] sm:$0xff]
    %v390 = vsel %vm388, 1, 0
    %391 = vset.pattern.permute.xlu0 0
    %392 = vperm.xlu0 %391, %v390
    %v393 = vpop.permute.xlu0 %392
    %vm394 = vcmp.eq.s32.totalorder %v393, 1
    %v395 = vsel %vm394, %v389, 0.0
    %v396 = vpack.c.bf16 %v395, %v395
    %v398 = vlaneseq
    %v399 = vshrl.u32 %v398, 7
    %v400 = vsub.s32 0, %v399
    %v401 = vrot.slane %v139, %v400
    %v402 = vlaneseq
    %v403 = vshrl.u32 %v402, 7
    %v404 = vsub.s32 1, %v403
    %v405 = vrot.slane %v139, %v404
    %v406 = vlaneseq
    %v407 = vshrl.u32 %v406, 7
    %v408 = vsub.s32 2, %v407
    %v409 = vrot.slane %v139, %v408
    %v445 = vunpack.c.l.b16 %v75
    %v446 = vunpack.c.h.b16 %v75
    %v447 = vunpack.c.l.b16 %v76
    %v448 = vunpack.c.l.b16 %v77
    %v449 = vunpack.c.h.b16 %v77
    %v450 = vunpack.c.l.b16 %v78
    %v451 = vunpack.c.l.b16 %v79
    %v452 = vunpack.c.h.b16 %v79
    %v453 = vunpack.c.l.b16 %v80
    %v454 = vunpack.c.l.b16 %v81
    %v455 = vunpack.c.h.b16 %v81
    %v456 = vunpack.c.l.b16 %v82
    %v457 = vunpack.c.l.b16 %v83
    %v458 = vunpack.c.h.b16 %v83
    %v459 = vunpack.c.l.b16 %v84
    %v460 = vunpack.c.l.b16 %v85
    %v461 = vunpack.c.h.b16 %v85
    %v462 = vunpack.c.l.b16 %v86
    %v463 = vunpack.c.l.b16 %v87
    %v464 = vunpack.c.h.b16 %v87
    %v465 = vunpack.c.l.b16 %v88
    %v466 = vunpack.c.l.b16 %v89
    %v467 = vunpack.c.h.b16 %v89
    %v468 = vunpack.c.l.b16 %v90
    %v469 = vunpack.c.l.b16 %v91
    %v470 = vunpack.c.h.b16 %v91
    %v471 = vunpack.c.l.b16 %v92
    %v472 = vunpack.c.l.b16 %v93
    %v473 = vunpack.c.h.b16 %v93
    %v474 = vunpack.c.l.b16 %v94
    %v475 = vunpack.c.l.b16 %v95
    %v476 = vunpack.c.h.b16 %v95
    %v477 = vunpack.c.l.b16 %v96
    %v478 = vunpack.c.l.b16 %v97
    %v479 = vunpack.c.h.b16 %v97
    %v480 = vunpack.c.l.b16 %v98
    %v481 = vunpack.c.l.b16 %v99
    %v482 = vunpack.c.h.b16 %v99
    %v483 = vunpack.c.l.b16 %v100
    %v484 = vunpack.c.l.b16 %v101
    %v485 = vunpack.c.h.b16 %v101
    %v486 = vunpack.c.l.b16 %v102
    %v487 = vunpack.c.l.b16 %v103
    %v488 = vunpack.c.h.b16 %v103
    %v489 = vunpack.c.l.b16 %v104
    %v490 = vunpack.c.l.b16 %v105
    %v491 = vunpack.c.h.b16 %v105
    %v492 = vunpack.c.l.b16 %v106
    %v493 = vpack.c.b16 %v448, %v445
    %v494 = vpack.c.b16 %v449, %v446
    %v495 = vpack.c.b16 %v450, %v447
    %v496 = vpack.c.b16 %v454, %v451
    %v497 = vpack.c.b16 %v455, %v452
    %v498 = vpack.c.b16 %v456, %v453
    %v499 = vpack.c.b16 %v460, %v457
    %v500 = vpack.c.b16 %v461, %v458
    %v501 = vpack.c.b16 %v462, %v459
    %v502 = vpack.c.b16 %v466, %v463
    %v503 = vpack.c.b16 %v467, %v464
    %v504 = vpack.c.b16 %v468, %v465
    %v505 = vpack.c.b16 %v472, %v469
    %v506 = vpack.c.b16 %v473, %v470
    %v507 = vpack.c.b16 %v474, %v471
    %v508 = vpack.c.b16 %v478, %v475
    %v509 = vpack.c.b16 %v479, %v476
    %v510 = vpack.c.b16 %v480, %v477
    %v511 = vpack.c.b16 %v484, %v481
    %v512 = vpack.c.b16 %v485, %v482
    %v513 = vpack.c.b16 %v486, %v483
    %v514 = vpack.c.b16 %v490, %v487
    %v515 = vpack.c.b16 %v491, %v488
    %v516 = vpack.c.b16 %v492, %v489
    %541 = vmatprep.subr.bf16.mxu0 %v494
    %542 = vmatpush1.bf16.msra.mxu0 %v493
    %543 = vmatprep.subr.bf16.mxu0 %v497
    %544 = vmatpush1.bf16.msra.mxu0 %v496
    %545 = vmatprep.subr.bf16.mxu0 %v500
    %546 = vmatpush1.bf16.msra.mxu0 %v499
    %547 = vmatprep.subr.bf16.mxu0 %v503
    %548 = vmatpush1.bf16.msra.mxu0 %v502
    %549 = vmatprep.subr.bf16.mxu0 %v506
    %550 = vmatpush1.bf16.msra.mxu0 %v505
    %551 = vmatprep.subr.bf16.mxu0 %v509
    %552 = vmatpush1.bf16.msra.mxu0 %v508
    %553 = vmatprep.subr.bf16.mxu0 %v512
    %554 = vmatpush1.bf16.msra.mxu0 %v511
    %555 = vmatprep.subr.bf16.mxu0 %v515
    %556 = vmatpush1.bf16.msra.mxu0 %v514
    %557 = vmatprep.subr.bf16.mxu0 0
    %558 = vmatpush1.bf16.msra.mxu0 0
    %559 = vmatprep.subr.bf16.mxu0 0
    %560 = vmatpush1.bf16.msra.mxu0 0
    %561 = vmatprep.subr.bf16.mxu0 0
    %562 = vmatpush1.bf16.msra.mxu0 0
    %563 = vmatprep.subr.bf16.mxu0 0
    %564 = vmatpush1.bf16.msra.mxu0 0
    %565 = vmatprep.subr.bf16.mxu0 0
    %566 = vmatpush1.bf16.msra.mxu0 0
    %567 = vmatprep.subr.bf16.mxu0 0
    %568 = vmatpush1.bf16.msra.mxu0 0
    %569 = vmatprep.subr.bf16.mxu0 0
    %570 = vmatpush1.bf16.msra.mxu0 0
    %571 = vmatprep.subr.bf16.mxu0 0
    %572 = vmatpush1.bf16.msra.mxu0 0
    %573 = vmatprep.mubr.bf16.mxu0 0
    %574 = vmatmul.mubr.bf16.gmra.mrb[0].mxu0 %v396
    %v575 = vpop.f32.mrb[0].mxu0
    %v576 = vadd.f32 %v401, %v575
    %v577 = vpop.f32.mrb[0].mxu0
    %v578 = vadd.f32 %v405, %v577
    %v579 = vpop.f32.mrb[0].mxu0
    %v580 = vpop.f32.mrb[0].mxu0
    %581 = vdwg.mxu0
    %582 = vmatprep.subr.bf16.mxu0 0
    %583 = vmatpush1.bf16.msra.mxu0 %v495
    %584 = vmatprep.subr.bf16.mxu0 0
    %585 = vmatpush1.bf16.msra.mxu0 %v498
    %586 = vmatprep.subr.bf16.mxu0 0
    %587 = vmatpush1.bf16.msra.mxu0 %v501
    %588 = vmatprep.subr.bf16.mxu0 0
    %589 = vmatpush1.bf16.msra.mxu0 %v504
    %590 = vmatprep.subr.bf16.mxu0 0
    %591 = vmatpush1.bf16.msra.mxu0 %v507
    %592 = vmatprep.subr.bf16.mxu0 0
    %593 = vmatpush1.bf16.msra.mxu0 %v510
    %594 = vmatprep.subr.bf16.mxu0 0
    %595 = vmatpush1.bf16.msra.mxu0 %v513
    %596 = vmatprep.subr.bf16.mxu0 0
    %597 = vmatpush1.bf16.msra.mxu0 %v516
    %598 = vmatprep.subr.bf16.mxu0 0
    %599 = vmatpush1.bf16.msra.mxu0 0
    %600 = vmatprep.subr.bf16.mxu0 0
    %601 = vmatpush1.bf16.msra.mxu0 0
    %602 = vmatprep.subr.bf16.mxu0 0
    %603 = vmatpush1.bf16.msra.mxu0 0
    %604 = vmatprep.subr.bf16.mxu0 0
    %605 = vmatpush1.bf16.msra.mxu0 0
    %606 = vmatprep.subr.bf16.mxu0 0
    %607 = vmatpush1.bf16.msra.mxu0 0
    %608 = vmatprep.subr.bf16.mxu0 0
    %609 = vmatpush1.bf16.msra.mxu0 0
    %610 = vmatprep.subr.bf16.mxu0 0
    %611 = vmatpush1.bf16.msra.mxu0 0
    %612 = vmatprep.subr.bf16.mxu0 0
    %613 = vmatpush1.bf16.msra.mxu0 0
    %614 = vmatprep.mubr.bf16.mxu0 0
    %615 = vmatmul.mubr.bf16.gmra.mrb[0].mxu0 %v396
    %v616 = vpop.f32.mrb[0].mxu0
    %v617 = vadd.f32 %v409, %v616
    %v618 = vpop.f32.mrb[0].mxu0
    %v619 = vpop.f32.mrb[0].mxu0
    %v620 = vpop.f32.mrb[0].mxu0
    %621 = vdwg.mxu0
    %v622 = vadd.f32 %v576, %v341
    %v623 = vxor.u32 %v622, 2147483648
    %v624 = vmul.f32 %v623, 1.442695
    %v625 = vpow.pop %v624
    %v626 = vadd.f32 %v625, 1.0
    %v627 = vrcp.pop %v626
    %v628 = vmul.f32 1.0, %v627
    %v629 = vadd.f32 %v578, %v343
    %v630 = vxor.u32 %v629, 2147483648
    %v631 = vmul.f32 %v630, 1.442695
    %v632 = vpow.pop %v631
    %v633 = vadd.f32 %v632, 1.0
    %v634 = vrcp.pop %v633
    %v635 = vmul.f32 1.0, %v634
    %v636 = vmul.f32 %v628, %v382
    %v637 = vadd.f32 %v617, %v636
    %v638 = vtanh.pop %v637
    %v639 = vsub.f32 1.0, %v635
    %v640 = vmul.f32 %v639, %v638
    %v641 = vmul.f32 %v635, %v160
    %v642 = vadd.f32 %v640, %v641
    %v643 = vpack.c.bf16 %v642, %v642
    %v645 = vlaneseq
    %v646 = vshrl.u32 %v645, 7
    %v647 = vsub.s32 0, %v646
    %v648 = vrot.slane %v157, %v647
    %v666 = vunpack.c.l.b16 %v141
    %v667 = vunpack.c.l.b16 %v142
    %v668 = vunpack.c.l.b16 %v143
    %v669 = vunpack.c.l.b16 %v144
    %v670 = vunpack.c.l.b16 %v145
    %v671 = vunpack.c.l.b16 %v146
    %v672 = vunpack.c.l.b16 %v147
    %v673 = vunpack.c.l.b16 %v148
    %v674 = vunpack.c.l.b16 %v149
    %v675 = vunpack.c.l.b16 %v150
    %v676 = vunpack.c.l.b16 %v151
    %v677 = vunpack.c.l.b16 %v152
    %v678 = vunpack.c.l.b16 %v153
    %v679 = vunpack.c.l.b16 %v154
    %v680 = vunpack.c.l.b16 %v155
    %v681 = vunpack.c.l.b16 %v156
    %v682 = vpack.c.b16 %v667, %v666
    %v683 = vpack.c.b16 %v669, %v668
    %v684 = vpack.c.b16 %v671, %v670
    %v685 = vpack.c.b16 %v673, %v672
    %v686 = vpack.c.b16 %v675, %v674
    %v687 = vpack.c.b16 %v677, %v676
    %v688 = vpack.c.b16 %v679, %v678
    %v689 = vpack.c.b16 %v681, %v680
    %698 = vmatprep.subr.bf16.mxu0 0
    %699 = vmatpush1.bf16.msra.mxu0 %v682
    %700 = vmatprep.subr.bf16.mxu0 0
    %701 = vmatpush1.bf16.msra.mxu0 %v683
    %702 = vmatprep.subr.bf16.mxu0 0
    %703 = vmatpush1.bf16.msra.mxu0 %v684
    %704 = vmatprep.subr.bf16.mxu0 0
    %705 = vmatpush1.bf16.msra.mxu0 %v685
    %706 = vmatprep.subr.bf16.mxu0 0
    %707 = vmatpush1.bf16.msra.mxu0 %v686
    %708 = vmatprep.subr.bf16.mxu0 0
    %709 = vmatpush1.bf16.msra.mxu0 %v687
    %710 = vmatprep.subr.bf16.mxu0 0
    %711 = vmatpush1.bf16.msra.mxu0 %v688
    %712 = vmatprep.subr.bf16.mxu0 0
    %713 = vmatpush1.bf16.msra.mxu0 %v689
    %714 = vmatprep.subr.bf16.mxu0 0
    %715 = vmatpush1.bf16.msra.mxu0 0
    %716 = vmatprep.subr.bf16.mxu0 0
    %717 = vmatpush1.bf16.msra.mxu0 0
    %718 = vmatprep.subr.bf16.mxu0 0
    %719 = vmatpush1.bf16.msra.mxu0 0
    %720 = vmatprep.subr.bf16.mxu0 0
    %721 = vmatpush1.bf16.msra.mxu0 0
    %722 = vmatprep.subr.bf16.mxu0 0
    %723 = vmatpush1.bf16.msra.mxu0 0
    %724 = vmatprep.subr.bf16.mxu0 0
    %725 = vmatpush1.bf16.msra.mxu0 0
    %726 = vmatprep.subr.bf16.mxu0 0
    %727 = vmatpush1.bf16.msra.mxu0 0
    %728 = vmatprep.subr.bf16.mxu0 0
    %729 = vmatpush1.bf16.msra.mxu0 0
    %730 = vmatprep.mubr.bf16.mxu0 0
    %731 = vmatmul.mubr.bf16.gmra.mrb[0].mxu0 %v643
    %v732 = vpop.f32.mrb[0].mxu0
    %v733 = vadd.f32 %v648, %v732
    %v734 = vpop.f32.mrb[0].mxu0
    %v735 = vpop.f32.mrb[0].mxu0
    %v736 = vpop.f32.mrb[0].mxu0
    %737 = vdwg.mxu0
    %738 = vmax.xlane.f32.xlu0 %v733
    %v739 = vpop.xlane.xlu0 %738
    %v740 = vsub.f32 %v733, %v739
    %v741 = vmul.f32 %v740, 1.442695
    %v742 = vpow.pop %v741
    %743 = vadd.xlane.f32.xlu0 %v742
    %v744 = vpop.xlane.xlu0 %743
    %v745 = vlog2.pop %v744
    %v746 = vmul.f32 %v745, 0.6931472
    %v747 = vsub.f32 %v740, %v746
    %748 = vst [vmem:[#allocation8] sm:$0xff] %v747
    %vm749 = vcmp.ge.f32.partialorder %v740, 0.0
    %v750 = vsel %vm749, %v159, 128
    %v751 = vand.u32 %v750, 65535
    %v752 = vshra.s32 %v750, 16
    %v753 = vcvt.s32.f32 %v751
    %v754 = vcvt.s32.f32 %v752
    %755 = vmin.xlane.f32.xlu0 %v754
    %v756 = vpop.xlane.xlu0 %755
    %vm757 = vcmp.eq.f32.partialorder %v754, %v756
    %v758 = vsel %vm757, %v753, inf
    %759 = vmin.xlane.f32.xlu0 %v758
    %v760 = vpop.xlane.xlu0 %759
    %v761 = vcvt.f32.s32 %v760
    %v762 = vcvt.f32.s32 %v756
    %v763 = vshll.u32 %v762, 16
    %v764 = vadd.s32 %v763, %v761
    %vm765 = vcmp.eq.s32.totalorder %v159, %v764
    %v766 = vsel %vm765, 1, 0
    %v767 = vcvt.s32.f32 %v766
    %768 = vmatprep.subr.bf16.mxu0 %v259
    %769 = vmatpush1.bf16.msra.mxu0 %v258
    %770 = vmatprep.subr.bf16.mxu0 %v262
    %771 = vmatpush1.bf16.msra.mxu0 %v261
    %772 = vmatprep.subr.bf16.mxu0 %v265
    %773 = vmatpush1.bf16.msra.mxu0 %v264
    %774 = vmatprep.subr.bf16.mxu0 %v268
    %775 = vmatpush1.bf16.msra.mxu0 %v267
    %776 = vmatprep.subr.bf16.mxu0 %v271
    %777 = vmatpush1.bf16.msra.mxu0 %v270
    %778 = vmatprep.subr.bf16.mxu0 %v274
    %779 = vmatpush1.bf16.msra.mxu0 %v273
    %780 = vmatprep.subr.bf16.mxu0 %v277
    %781 = vmatpush1.bf16.msra.mxu0 %v276
    %782 = vmatprep.subr.bf16.mxu0 %v280
    %783 = vmatpush1.bf16.msra.mxu0 %v279
    %784 = vmatprep.subr.bf16.mxu0 0
    %785 = vmatpush1.bf16.msra.mxu0 0
    %786 = vmatprep.subr.bf16.mxu0 0
    %787 = vmatpush1.bf16.msra.mxu0 0
    %788 = vmatprep.subr.bf16.mxu0 0
    %789 = vmatpush1.bf16.msra.mxu0 0
    %790 = vmatprep.subr.bf16.mxu0 0
    %791 = vmatpush1.bf16.msra.mxu0 0
    %792 = vmatprep.subr.bf16.mxu0 0
    %793 = vmatpush1.bf16.msra.mxu0 0
    %794 = vmatprep.subr.bf16.mxu0 0
    %795 = vmatpush1.bf16.msra.mxu0 0
    %796 = vmatprep.subr.bf16.mxu0 0
    %797 = vmatpush1.bf16.msra.mxu0 0
    %798 = vmatprep.subr.bf16.mxu0 0
    %799 = vmatpush1.bf16.msra.mxu0 0
    %800 = vmatprep.mubr.bf16.mxu0 0
    %801 = vmatmul.mubr.bf16.gmra.mrb[0].mxu0 %v643
    %v802 = vpop.f32.mrb[0].mxu0
    %v803 = vadd.f32 %v166, %v802
    %v804 = vpop.f32.mrb[0].mxu0
    %v805 = vadd.f32 %v170, %v804
    %v806 = vpop.f32.mrb[0].mxu0
    %v807 = vpop.f32.mrb[0].mxu0
    %808 = vdwg.mxu0
    %809 = vmatprep.subr.bf16.mxu0 0
    %810 = vmatpush1.bf16.msra.mxu0 %v260
    %811 = vmatprep.subr.bf16.mxu0 0
    %812 = vmatpush1.bf16.msra.mxu0 %v263
    %813 = vmatprep.subr.bf16.mxu0 0
    %814 = vmatpush1.bf16.msra.mxu0 %v266
    %815 = vmatprep.subr.bf16.mxu0 0
    %816 = vmatpush1.bf16.msra.mxu0 %v269
    %817 = vmatprep.subr.bf16.mxu0 0
    %818 = vmatpush1.bf16.msra.mxu0 %v272
    %819 = vmatprep.subr.bf16.mxu0 0
    %820 = vmatpush1.bf16.msra.mxu0 %v275
    %821 = vmatprep.subr.bf16.mxu0 0
    %822 = vmatpush1.bf16.msra.mxu0 %v278
    %823 = vmatprep.subr.bf16.mxu0 0
    %824 = vmatpush1.bf16.msra.mxu0 %v281
    %825 = vmatprep.subr.bf16.mxu0 0
    %826 = vmatpush1.bf16.msra.mxu0 0
    %827 = vmatprep.subr.bf16.mxu0 0
    %828 = vmatpush1.bf16.msra.mxu0 0
    %829 = vmatprep.subr.bf16.mxu0 0
    %830 = vmatpush1.bf16.msra.mxu0 0
    %831 = vmatprep.subr.bf16.mxu0 0
    %832 = vmatpush1.bf16.msra.mxu0 0
    %833 = vmatprep.subr.bf16.mxu0 0
    %834 = vmatpush1.bf16.msra.mxu0 0
    %835 = vmatprep.subr.bf16.mxu0 0
    %836 = vmatpush1.bf16.msra.mxu0 0
    %837 = vmatprep.subr.bf16.mxu0 0
    %838 = vmatpush1.bf16.msra.mxu0 0
    %839 = vmatprep.subr.bf16.mxu0 0
    %840 = vmatpush1.bf16.msra.mxu0 0
    %841 = vmatprep.mubr.bf16.mxu0 0
    %842 = vmatmul.mubr.bf16.gmra.mrb[0].mxu0 %v643
    %v843 = vpop.f32.mrb[0].mxu0
    %v844 = vadd.f32 %v174, %v843
    %v845 = vpop.f32.mrb[0].mxu0
    %v846 = vpop.f32.mrb[0].mxu0
    %v847 = vpop.f32.mrb[0].mxu0
    %848 = vdwg.mxu0
    %s849 = scalar_lea.vmem %s0, 8
    %v850 = vld [vmem:[%s849] sm:$0xff]
    %vm851 = vcmp.ne.f32.partialorder %v850, 0.0
    %s852 = scalar_lea.vmem [#allocation2], 8
    %v853 = vld [vmem:[%s852] sm:$0xff]
    %v854 = vsel %vm851, 1, 0
    %855 = vset.pattern.permute.xlu0 0
    %856 = vperm.xlu0 %855, %v854
    %v857 = vpop.permute.xlu0 %856
    %vm858 = vcmp.eq.s32.totalorder %v857, 1
    %v859 = vsel %vm858, %v853, %v767
    %v860 = vpack.c.bf16 %v859, %v859
    %861 = vmatprep.subr.bf16.mxu0 %v494
    %862 = vmatpush1.bf16.msra.mxu0 %v493
    %863 = vmatprep.subr.bf16.mxu0 %v497
    %864 = vmatpush1.bf16.msra.mxu0 %v496
    %865 = vmatprep.subr.bf16.mxu0 %v500
    %866 = vmatpush1.bf16.msra.mxu0 %v499
    %867 = vmatprep.subr.bf16.mxu0 %v503
    %868 = vmatpush1.bf16.msra.mxu0 %v502
    %869 = vmatprep.subr.bf16.mxu0 %v506
    %870 = vmatpush1.bf16.msra.mxu0 %v505
    %871 = vmatprep.subr.bf16.mxu0 %v509
    %872 = vmatpush1.bf16.msra.mxu0 %v508
    %873 = vmatprep.subr.bf16.mxu0 %v512
    %874 = vmatpush1.bf16.msra.mxu0 %v511
    %875 = vmatprep.subr.bf16.mxu0 %v515
    %876 = vmatpush1.bf16.msra.mxu0 %v514
    %877 = vmatprep.subr.bf16.mxu0 0
    %878 = vmatpush1.bf16.msra.mxu0 0
    %879 = vmatprep.subr.bf16.mxu0 0
    %880 = vmatpush1.bf16.msra.mxu0 0
    %881 = vmatprep.subr.bf16.mxu0 0
    %882 = vmatpush1.bf16.msra.mxu0 0
    %883 = vmatprep.subr.bf16.mxu0 0
    %884 = vmatpush1.bf16.msra.mxu0 0
    %885 = vmatprep.subr.bf16.mxu0 0
    %886 = vmatpush1.bf16.msra.mxu0 0
    %887 = vmatprep.subr.bf16.mxu0 0
    %888 = vmatpush1.bf16.msra.mxu0 0
    %889 = vmatprep.subr.bf16.mxu0 0
    %890 = vmatpush1.bf16.msra.mxu0 0
    %891 = vmatprep.subr.bf16.mxu0 0
    %892 = vmatpush1.bf16.msra.mxu0 0
    %893 = vmatprep.mubr.bf16.mxu0 0
    %894 = vmatmul.mubr.bf16.gmra.mrb[0].mxu0 %v860
    %v895 = vpop.f32.mrb[0].mxu0
    %v896 = vadd.f32 %v401, %v895
    %v897 = vpop.f32.mrb[0].mxu0
    %v898 = vadd.f32 %v405, %v897
    %v899 = vpop.f32.mrb[0].mxu0
    %v900 = vpop.f32.mrb[0].mxu0
    %901 = vdwg.mxu0
    %902 = vmatprep.subr.bf16.mxu0 0
    %903 = vmatpush1.bf16.msra.mxu0 %v495
    %904 = vmatprep.subr.bf16.mxu0 0
    %905 = vmatpush1.bf16.msra.mxu0 %v498
    %906 = vmatprep.subr.bf16.mxu0 0
    %907 = vmatpush1.bf16.msra.mxu0 %v501
    %908 = vmatprep.subr.bf16.mxu0 0
    %909 = vmatpush1.bf16.msra.mxu0 %v504
    %910 = vmatprep.subr.bf16.mxu0 0
    %911 = vmatpush1.bf16.msra.mxu0 %v507
    %912 = vmatprep.subr.bf16.mxu0 0
    %913 = vmatpush1.bf16.msra.mxu0 %v510
    %914 = vmatprep.subr.bf16.mxu0 0
    %915 = vmatpush1.bf16.msra.mxu0 %v513
    %916 = vmatprep.subr.bf16.mxu0 0
    %917 = vmatpush1.bf16.msra.mxu0 %v516
    %918 = vmatprep.subr.bf16.mxu0 0
    %919 = vmatpush1.bf16.msra.mxu0 0
    %920 = vmatprep.subr.bf16.mxu0 0
    %921 = vmatpush1.bf16.msra.mxu0 0
    %922 = vmatprep.subr.bf16.mxu0 0
    %923 = vmatpush1.bf16.msra.mxu0 0
    %924 = vmatprep.subr.bf16.mxu0 0
    %925 = vmatpush1.bf16.msra.mxu0 0
    %926 = vmatprep.subr.bf16.mxu0 0
    %927 = vmatpush1.bf16.msra.mxu0 0
    %928 = vmatprep.subr.bf16.mxu0 0
    %929 = vmatpush1.bf16.msra.mxu0 0
    %930 = vmatprep.subr.bf16.mxu0 0
    %931 = vmatpush1.bf16.msra.mxu0 0
    %932 = vmatprep.subr.bf16.mxu0 0
    %933 = vmatpush1.bf16.msra.mxu0 0
    %934 = vmatprep.mubr.bf16.mxu0 0
    %935 = vmatmul.mubr.bf16.gmra.mrb[0].mxu0 %v860
    %v936 = vpop.f32.mrb[0].mxu0
    %v937 = vadd.f32 %v409, %v936
    %v938 = vpop.f32.mrb[0].mxu0
    %v939 = vpop.f32.mrb[0].mxu0
    %v940 = vpop.f32.mrb[0].mxu0
    %941 = vdwg.mxu0
    %v942 = vadd.f32 %v896, %v803
    %v943 = vxor.u32 %v942, 2147483648
    %v944 = vmul.f32 %v943, 1.442695
    %v945 = vpow.pop %v944
    %v946 = vadd.f32 %v945, 1.0
    %v947 = vrcp.pop %v946
    %v948 = vmul.f32 1.0, %v947
    %v949 = vadd.f32 %v898, %v805
    %v950 = vxor.u32 %v949, 2147483648
    %v951 = vmul.f32 %v950, 1.442695
    %v952 = vpow.pop %v951
    %v953 = vadd.f32 %v952, 1.0
    %v954 = vrcp.pop %v953
    %v955 = vmul.f32 1.0, %v954
    %v956 = vmul.f32 %v948, %v844
    %v957 = vadd.f32 %v937, %v956
    %v958 = vtanh.pop %v957
    %v959 = vsub.f32 1.0, %v955
    %v960 = vmul.f32 %v959, %v958
    %v961 = vmul.f32 %v955, %v642
    %v962 = vadd.f32 %v960, %v961
    %v963 = vpack.c.bf16 %v962, %v962
    %964 = vmatprep.subr.bf16.mxu0 0
    %965 = vmatpush1.bf16.msra.mxu0 %v682
    %966 = vmatprep.subr.bf16.mxu0 0
    %967 = vmatpush1.bf16.msra.mxu0 %v683
    %968 = vmatprep.subr.bf16.mxu0 0
    %969 = vmatpush1.bf16.msra.mxu0 %v684
    %970 = vmatprep.subr.bf16.mxu0 0
    %971 = vmatpush1.bf16.msra.mxu0 %v685
    %972 = vmatprep.subr.bf16.mxu0 0
    %973 = vmatpush1.bf16.msra.mxu0 %v686
    %974 = vmatprep.subr.bf16.mxu0 0
    %975 = vmatpush1.bf16.msra.mxu0 %v687
    %976 = vmatprep.subr.bf16.mxu0 0
    %977 = vmatpush1.bf16.msra.mxu0 %v688
    %978 = vmatprep.subr.bf16.mxu0 0
    %979 = vmatpush1.bf16.msra.mxu0 %v689
    %980 = vmatprep.subr.bf16.mxu0 0
    %981 = vmatpush1.bf16.msra.mxu0 0
    %982 = vmatprep.subr.bf16.mxu0 0
    %983 = vmatpush1.bf16.msra.mxu0 0
    %984 = vmatprep.subr.bf16.mxu0 0
    %985 = vmatpush1.bf16.msra.mxu0 0
    %986 = vmatprep.subr.bf16.mxu0 0
    %987 = vmatpush1.bf16.msra.mxu0 0
    %988 = vmatprep.subr.bf16.mxu0 0
    %989 = vmatpush1.bf16.msra.mxu0 0
    %990 = vmatprep.subr.bf16.mxu0 0
    %991 = vmatpush1.bf16.msra.mxu0 0
    %992 = vmatprep.subr.bf16.mxu0 0
    %993 = vmatpush1.bf16.msra.mxu0 0
    %994 = vmatprep.subr.bf16.mxu0 0
    %995 = vmatpush1.bf16.msra.mxu0 0
    %996 = vmatprep.mubr.bf16.mxu0 0
    %997 = vmatmul.mubr.bf16.gmra.mrb[0].mxu0 %v963
    %v998 = vpop.f32.mrb[0].mxu0
    %v999 = vadd.f32 %v648, %v998
    %v1000 = vpop.f32.mrb[0].mxu0
    %v1001 = vpop.f32.mrb[0].mxu0
    %v1002 = vpop.f32.mrb[0].mxu0
    %1003 = vdwg.mxu0
    %1004 = vmax.xlane.f32.xlu0 %v999
    %v1005 = vpop.xlane.xlu0 %1004
    %v1006 = vsub.f32 %v999, %v1005
    %v1007 = vmul.f32 %v1006, 1.442695
    %v1008 = vpow.pop %v1007
    %1009 = vadd.xlane.f32.xlu0 %v1008
    %v1010 = vpop.xlane.xlu0 %1009
    %v1011 = vlog2.pop %v1010
    %v1012 = vmul.f32 %v1011, 0.6931472
    %v1013 = vsub.f32 %v1006, %v1012
    %s1014 = scalar_lea.vmem [#allocation8], 8
    %1015 = vst [vmem:[%s1014] sm:$0xff] %v1013
    %vm1016 = vcmp.ge.f32.partialorder %v1006, 0.0
    %v1017 = vsel %vm1016, %v159, 128
    %v1018 = vand.u32 %v1017, 65535
    %v1019 = vshra.s32 %v1017, 16
    %v1020 = vcvt.s32.f32 %v1018
    %v1021 = vcvt.s32.f32 %v1019
    %1022 = vmin.xlane.f32.xlu0 %v1021
    %v1023 = vpop.xlane.xlu0 %1022
    %vm1024 = vcmp.eq.f32.partialorder %v1021, %v1023
    %v1025 = vsel %vm1024, %v1020, inf
    %1026 = vmin.xlane.f32.xlu0 %v1025
    %v1027 = vpop.xlane.xlu0 %1026
    %v1028 = vcvt.f32.s32 %v1027
    %v1029 = vcvt.f32.s32 %v1023
    %v1030 = vshll.u32 %v1029, 16
    %v1031 = vadd.s32 %v1030, %v1028
    %vm1032 = vcmp.eq.s32.totalorder %v159, %v1031
    %v1033 = vsel %vm1032, 1, 0
    %v1034 = vcvt.s32.f32 %v1033
    %1035 = vmatprep.subr.bf16.mxu0 %v259
    %1036 = vmatpush1.bf16.msra.mxu0 %v258
    %1037 = vmatprep.subr.bf16.mxu0 %v262
    %1038 = vmatpush1.bf16.msra.mxu0 %v261
    %1039 = vmatprep.subr.bf16.mxu0 %v265
    %1040 = vmatpush1.bf16.msra.mxu0 %v264
    %1041 = vmatprep.subr.bf16.mxu0 %v268
    %1042 = vmatpush1.bf16.msra.mxu0 %v267
    %1043 = vmatprep.subr.bf16.mxu0 %v271
    %1044 = vmatpush1.bf16.msra.mxu0 %v270
    %1045 = vmatprep.subr.bf16.mxu0 %v274
    %1046 = vmatpush1.bf16.msra.mxu0 %v273
    %1047 = vmatprep.subr.bf16.mxu0 %v277
    %1048 = vmatpush1.bf16.msra.mxu0 %v276
    %1049 = vmatprep.subr.bf16.mxu0 %v280
    %1050 = vmatpush1.bf16.msra.mxu0 %v279
    %1051 = vmatprep.subr.bf16.mxu0 0
    %1052 = vmatpush1.bf16.msra.mxu0 0
    %1053 = vmatprep.subr.bf16.mxu0 0
    %1054 = vmatpush1.bf16.msra.mxu0 0
    %1055 = vmatprep.subr.bf16.mxu0 0
    %1056 = vmatpush1.bf16.msra.mxu0 0
    %1057 = vmatprep.subr.bf16.mxu0 0
    %1058 = vmatpush1.bf16.msra.mxu0 0
    %1059 = vmatprep.subr.bf16.mxu0 0
    %1060 = vmatpush1.bf16.msra.mxu0 0
    %1061 = vmatprep.subr.bf16.mxu0 0
    %1062 = vmatpush1.bf16.msra.mxu0 0
    %1063 = vmatprep.subr.bf16.mxu0 0
    %1064 = vmatpush1.bf16.msra.mxu0 0
    %1065 = vmatprep.subr.bf16.mxu0 0
    %1066 = vmatpush1.bf16.msra.mxu0 0
    %1067 = vmatprep.mubr.bf16.mxu0 0
    %1068 = vmatmul.mubr.bf16.gmra.mrb[0].mxu0 %v963
    %v1069 = vpop.f32.mrb[0].mxu0
    %v1070 = vadd.f32 %v166, %v1069
    %v1071 = vpop.f32.mrb[0].mxu0
    %v1072 = vadd.f32 %v170, %v1071
    %v1073 = vpop.f32.mrb[0].mxu0
    %v1074 = vpop.f32.mrb[0].mxu0
    %1075 = vdwg.mxu0
    %1076 = vmatprep.subr.bf16.mxu0 0
    %1077 = vmatpush1.bf16.msra.mxu0 %v260
    %1078 = vmatprep.subr.bf16.mxu0 0
    %1079 = vmatpush1.bf16.msra.mxu0 %v263
    %1080 = vmatprep.subr.bf16.mxu0 0
    %1081 = vmatpush1.bf16.msra.mxu0 %v266
    %1082 = vmatprep.subr.bf16.mxu0 0
    %1083 = vmatpush1.bf16.msra.mxu0 %v269
    %1084 = vmatprep.subr.bf16.mxu0 0
    %1085 = vmatpush1.bf16.msra.mxu0 %v272
    %1086 = vmatprep.subr.bf16.mxu0 0
    %1087 = vmatpush1.bf16.msra.mxu0 %v275
    %1088 = vmatprep.subr.bf16.mxu0 0
    %1089 = vmatpush1.bf16.msra.mxu0 %v278
    %1090 = vmatprep.subr.bf16.mxu0 0
    %1091 = vmatpush1.bf16.msra.mxu0 %v281
    %1092 = vmatprep.subr.bf16.mxu0 0
    %1093 = vmatpush1.bf16.msra.mxu0 0
    %1094 = vmatprep.subr.bf16.mxu0 0
    %1095 = vmatpush1.bf16.msra.mxu0 0
    %1096 = vmatprep.subr.bf16.mxu0 0
    %1097 = vmatpush1.bf16.msra.mxu0 0
    %1098 = vmatprep.subr.bf16.mxu0 0
    %1099 = vmatpush1.bf16.msra.mxu0 0
    %1100 = vmatprep.subr.bf16.mxu0 0
    %1101 = vmatpush1.bf16.msra.mxu0 0
    %1102 = vmatprep.subr.bf16.mxu0 0
    %1103 = vmatpush1.bf16.msra.mxu0 0
    %1104 = vmatprep.subr.bf16.mxu0 0
    %1105 = vmatpush1.bf16.msra.mxu0 0
    %1106 = vmatprep.subr.bf16.mxu0 0
    %1107 = vmatpush1.bf16.msra.mxu0 0
    %1108 = vmatprep.mubr.bf16.mxu0 0
    %1109 = vmatmul.mubr.bf16.gmra.mrb[0].mxu0 %v963
    %v1110 = vpop.f32.mrb[0].mxu0
    %v1111 = vadd.f32 %v174, %v1110
    %v1112 = vpop.f32.mrb[0].mxu0
    %v1113 = vpop.f32.mrb[0].mxu0
    %v1114 = vpop.f32.mrb[0].mxu0
    %1115 = vdwg.mxu0
    %s1116 = scalar_lea.vmem %s0, 16
    %v1117 = vld [vmem:[%s1116] sm:$0xff]
    %vm1118 = vcmp.ne.f32.partialorder %v1117, 0.0
    %s1119 = scalar_lea.vmem [#allocation2], 16
    %v1120 = vld [vmem:[%s1119] sm:$0xff]
    %v1121 = vsel %vm1118, 1, 0
    %1122 = vset.pattern.permute.xlu0 0
    %1123 = vperm.xlu0 %1122, %v1121
    %v1124 = vpop.permute.xlu0 %1123
    %vm1125 = vcmp.eq.s32.totalorder %v1124, 1
    %v1126 = vsel %vm1125, %v1120, %v1034
    %v1127 = vpack.c.bf16 %v1126, %v1126
    %1128 = vmatprep.subr.bf16.mxu0 %v494
    %1129 = vmatpush1.bf16.msra.mxu0 %v493
    %1130 = vmatprep.subr.bf16.mxu0 %v497
    %1131 = vmatpush1.bf16.msra.mxu0 %v496
    %1132 = vmatprep.subr.bf16.mxu0 %v500
    %1133 = vmatpush1.bf16.msra.mxu0 %v499
    %1134 = vmatprep.subr.bf16.mxu0 %v503
    %1135 = vmatpush1.bf16.msra.mxu0 %v502
    %1136 = vmatprep.subr.bf16.mxu0 %v506
    %1137 = vmatpush1.bf16.msra.mxu0 %v505
    %1138 = vmatprep.subr.bf16.mxu0 %v509
    %1139 = vmatpush1.bf16.msra.mxu0 %v508
    %1140 = vmatprep.subr.bf16.mxu0 %v512
    %1141 = vmatpush1.bf16.msra.mxu0 %v511
    %1142 = vmatprep.subr.bf16.mxu0 %v515
    %1143 = vmatpush1.bf16.msra.mxu0 %v514
    %1144 = vmatprep.subr.bf16.mxu0 0
    %1145 = vmatpush1.bf16.msra.mxu0 0
    %1146 = vmatprep.subr.bf16.mxu0 0
    %1147 = vmatpush1.bf16.msra.mxu0 0
    %1148 = vmatprep.subr.bf16.mxu0 0
    %1149 = vmatpush1.bf16.msra.mxu0 0
    %1150 = vmatprep.subr.bf16.mxu0 0
    %1151 = vmatpush1.bf16.msra.mxu0 0
    %1152 = vmatprep.subr.bf16.mxu0 0
    %1153 = vmatpush1.bf16.msra.mxu0 0
    %1154 = vmatprep.subr.bf16.mxu0 0
    %1155 = vmatpush1.bf16.msra.mxu0 0
    %1156 = vmatprep.subr.bf16.mxu0 0
    %1157 = vmatpush1.bf16.msra.mxu0 0
    %1158 = vmatprep.subr.bf16.mxu0 0
    %1159 = vmatpush1.bf16.msra.mxu0 0
    %1160 = vmatprep.mubr.bf16.mxu0 0
    %1161 = vmatmul.mubr.bf16.gmra.mrb[0].mxu0 %v1127
    %v1162 = vpop.f32.mrb[0].mxu0
    %v1163 = vadd.f32 %v401, %v1162
    %v1164 = vpop.f32.mrb[0].mxu0
    %v1165 = vadd.f32 %v405, %v1164
    %v1166 = vpop.f32.mrb[0].mxu0
    %v1167 = vpop.f32.mrb[0].mxu0
    %1168 = vdwg.mxu0
    %1169 = vmatprep.subr.bf16.mxu0 0
    %1170 = vmatpush1.bf16.msra.mxu0 %v495
    %1171 = vmatprep.subr.bf16.mxu0 0
    %1172 = vmatpush1.bf16.msra.mxu0 %v498
    %1173 = vmatprep.subr.bf16.mxu0 0
    %1174 = vmatpush1.bf16.msra.mxu0 %v501
    %1175 = vmatprep.subr.bf16.mxu0 0
    %1176 = vmatpush1.bf16.msra.mxu0 %v504
    %1177 = vmatprep.subr.bf16.mxu0 0
    %1178 = vmatpush1.bf16.msra.mxu0 %v507
    %1179 = vmatprep.subr.bf16.mxu0 0
    %1180 = vmatpush1.bf16.msra.mxu0 %v510
    %1181 = vmatprep.subr.bf16.mxu0 0
    %1182 = vmatpush1.bf16.msra.mxu0 %v513
    %1183 = vmatprep.subr.bf16.mxu0 0
    %1184 = vmatpush1.bf16.msra.mxu0 %v516
    %1185 = vmatprep.subr.bf16.mxu0 0
    %1186 = vmatpush1.bf16.msra.mxu0 0
    %1187 = vmatprep.subr.bf16.mxu0 0
    %1188 = vmatpush1.bf16.msra.mxu0 0
    %1189 = vmatprep.subr.bf16.mxu0 0
    %1190 = vmatpush1.bf16.msra.mxu0 0
    %1191 = vmatprep.subr.bf16.mxu0 0
    %1192 = vmatpush1.bf16.msra.mxu0 0
    %1193 = vmatprep.subr.bf16.mxu0 0
    %1194 = vmatpush1.bf16.msra.mxu0 0
    %1195 = vmatprep.subr.bf16.mxu0 0
    %1196 = vmatpush1.bf16.msra.mxu0 0
    %1197 = vmatprep.subr.bf16.mxu0 0
    %1198 = vmatpush1.bf16.msra.mxu0 0
    %1199 = vmatprep.subr.bf16.mxu0 0
    %1200 = vmatpush1.bf16.msra.mxu0 0
    %1201 = vmatprep.mubr.bf16.mxu0 0
    %1202 = vmatmul.mubr.bf16.gmra.mrb[0].mxu0 %v1127
    %v1203 = vpop.f32.mrb[0].mxu0
    %v1204 = vadd.f32 %v409, %v1203
    %v1205 = vpop.f32.mrb[0].mxu0
    %v1206 = vpop.f32.mrb[0].mxu0
    %v1207 = vpop.f32.mrb[0].mxu0
    %1208 = vdwg.mxu0
    %v1209 = vadd.f32 %v1163, %v1070
    %v1210 = vxor.u32 %v1209, 2147483648
    %v1211 = vmul.f32 %v1210, 1.442695
    %v1212 = vpow.pop %v1211
    %v1213 = vadd.f32 %v1212, 1.0
    %v1214 = vrcp.pop %v1213
    %v1215 = vmul.f32 1.0, %v1214
    %v1216 = vadd.f32 %v1165, %v1072
    %v1217 = vxor.u32 %v1216, 2147483648
    %v1218 = vmul.f32 %v1217, 1.442695
    %v1219 = vpow.pop %v1218
    %v1220 = vadd.f32 %v1219, 1.0
    %v1221 = vrcp.pop %v1220
    %v1222 = vmul.f32 1.0, %v1221
    %v1223 = vmul.f32 %v1215, %v1111
    %v1224 = vadd.f32 %v1204, %v1223
    %v1225 = vtanh.pop %v1224
    %v1226 = vsub.f32 1.0, %v1222
    %v1227 = vmul.f32 %v1226, %v1225
    %v1228 = vmul.f32 %v1222, %v962
    %v1229 = vadd.f32 %v1227, %v1228
    %v1230 = vpack.c.bf16 %v1229, %v1229
    %1231 = vmatprep.subr.bf16.mxu0 0
    %1232 = vmatpush1.bf16.msra.mxu0 %v682
    %1233 = vmatprep.subr.bf16.mxu0 0
    %1234 = vmatpush1.bf16.msra.mxu0 %v683
    %1235 = vmatprep.subr.bf16.mxu0 0
    %1236 = vmatpush1.bf16.msra.mxu0 %v684
    %1237 = vmatprep.subr.bf16.mxu0 0
    %1238 = vmatpush1.bf16.msra.mxu0 %v685
    %1239 = vmatprep.subr.bf16.mxu0 0
    %1240 = vmatpush1.bf16.msra.mxu0 %v686
    %1241 = vmatprep.subr.bf16.mxu0 0
    %1242 = vmatpush1.bf16.msra.mxu0 %v687
    %1243 = vmatprep.subr.bf16.mxu0 0
    %1244 = vmatpush1.bf16.msra.mxu0 %v688
    %1245 = vmatprep.subr.bf16.mxu0 0
    %1246 = vmatpush1.bf16.msra.mxu0 %v689
    %1247 = vmatprep.subr.bf16.mxu0 0
    %1248 = vmatpush1.bf16.msra.mxu0 0
    %1249 = vmatprep.subr.bf16.mxu0 0
    %1250 = vmatpush1.bf16.msra.mxu0 0
    %1251 = vmatprep.subr.bf16.mxu0 0
    %1252 = vmatpush1.bf16.msra.mxu0 0
    %1253 = vmatprep.subr.bf16.mxu0 0
    %1254 = vmatpush1.bf16.msra.mxu0 0
    %1255 = vmatprep.subr.bf16.mxu0 0
    %1256 = vmatpush1.bf16.msra.mxu0 0
    %1257 = vmatprep.subr.bf16.mxu0 0
    %1258 = vmatpush1.bf16.msra.mxu0 0
    %1259 = vmatprep.subr.bf16.mxu0 0
    %1260 = vmatpush1.bf16.msra.mxu0 0
    %1261 = vmatprep.subr.bf16.mxu0 0
    %1262 = vmatpush1.bf16.msra.mxu0 0
    %1263 = vmatprep.mubr.bf16.mxu0 0
    %1264 = vmatmul.mubr.bf16.gmra.mrb[0].mxu0 %v1230
    %v1265 = vpop.f32.mrb[0].mxu0
    %v1266 = vadd.f32 %v648, %v1265
    %v1267 = vpop.f32.mrb[0].mxu0
    %v1268 = vpop.f32.mrb[0].mxu0
    %v1269 = vpop.f32.mrb[0].mxu0
    %1270 = vdwg.mxu0
    %1271 = vmax.xlane.f32.xlu0 %v1266
    %v1272 = vpop.xlane.xlu0 %1271
    %v1273 = vsub.f32 %v1266, %v1272
    %v1274 = vmul.f32 %v1273, 1.442695
    %v1275 = vpow.pop %v1274
    %1276 = vadd.xlane.f32.xlu0 %v1275
    %v1277 = vpop.xlane.xlu0 %1276
    %v1278 = vlog2.pop %v1277
    %v1279 = vmul.f32 %v1278, 0.6931472
    %v1280 = vsub.f32 %v1273, %v1279
    %s1281 = scalar_lea.vmem [#allocation8], 16
    %1282 = vst [vmem:[%s1281] sm:$0xff] %v1280
    %vm1283 = vcmp.ge.f32.partialorder %v1273, 0.0
    %v1284 = vsel %vm1283, %v159, 128
    %v1285 = vand.u32 %v1284, 65535
    %v1286 = vshra.s32 %v1284, 16
    %v1287 = vcvt.s32.f32 %v1285
    %v1288 = vcvt.s32.f32 %v1286
    %1289 = vmin.xlane.f32.xlu0 %v1288
    %v1290 = vpop.xlane.xlu0 %1289
    %vm1291 = vcmp.eq.f32.partialorder %v1288, %v1290
    %v1292 = vsel %vm1291, %v1287, inf
    %1293 = vmin.xlane.f32.xlu0 %v1292
    %v1294 = vpop.xlane.xlu0 %1293
    %v1295 = vcvt.f32.s32 %v1294
    %v1296 = vcvt.f32.s32 %v1290
    %v1297 = vshll.u32 %v1296, 16
    %v1298 = vadd.s32 %v1297, %v1295
    %vm1299 = vcmp.eq.s32.totalorder %v159, %v1298
    %v1300 = vsel %vm1299, 1, 0
    %v1301 = vcvt.s32.f32 %v1300
    %1302 = vmatprep.subr.bf16.mxu0 %v259
    %1303 = vmatpush1.bf16.msra.mxu0 %v258
    %1304 = vmatprep.subr.bf16.mxu0 %v262
    %1305 = vmatpush1.bf16.msra.mxu0 %v261
    %1306 = vmatprep.subr.bf16.mxu0 %v265
    %1307 = vmatpush1.bf16.msra.mxu0 %v264
    %1308 = vmatprep.subr.bf16.mxu0 %v268
    %1309 = vmatpush1.bf16.msra.mxu0 %v267
    %1310 = vmatprep.subr.bf16.mxu0 %v271
    %1311 = vmatpush1.bf16.msra.mxu0 %v270
    %1312 = vmatprep.subr.bf16.mxu0 %v274
    %1313 = vmatpush1.bf16.msra.mxu0 %v273
    %1314 = vmatprep.subr.bf16.mxu0 %v277
    %1315 = vmatpush1.bf16.msra.mxu0 %v276
    %1316 = vmatprep.subr.bf16.mxu0 %v280
    %1317 = vmatpush1.bf16.msra.mxu0 %v279
    %1318 = vmatprep.subr.bf16.mxu0 0
    %1319 = vmatpush1.bf16.msra.mxu0 0
    %1320 = vmatprep.subr.bf16.mxu0 0
    %1321 = vmatpush1.bf16.msra.mxu0 0
    %1322 = vmatprep.subr.bf16.mxu0 0
    %1323 = vmatpush1.bf16.msra.mxu0 0
    %1324 = vmatprep.subr.bf16.mxu0 0
    %1325 = vmatpush1.bf16.msra.mxu0 0
    %1326 = vmatprep.subr.bf16.mxu0 0
    %1327 = vmatpush1.bf16.msra.mxu0 0
    %1328 = vmatprep.subr.bf16.mxu0 0
    %1329 = vmatpush1.bf16.msra.mxu0 0
    %1330 = vmatprep.subr.bf16.mxu0 0
    %1331 = vmatpush1.bf16.msra.mxu0 0
    %1332 = vmatprep.subr.bf16.mxu0 0
    %1333 = vmatpush1.bf16.msra.mxu0 0
    %1334 = vmatprep.mubr.bf16.mxu0 0
    %1335 = vmatmul.mubr.bf16.gmra.mrb[0].mxu0 %v1230
    %v1336 = vpop.f32.mrb[0].mxu0
    %v1337 = vadd.f32 %v166, %v1336
    %v1338 = vpop.f32.mrb[0].mxu0
    %v1339 = vadd.f32 %v170, %v1338
    %v1340 = vpop.f32.mrb[0].mxu0
    %v1341 = vpop.f32.mrb[0].mxu0
    %1342 = vdwg.mxu0
    %1343 = vmatprep.subr.bf16.mxu0 0
    %1344 = vmatpush1.bf16.msra.mxu0 %v260
    %1345 = vmatprep.subr.bf16.mxu0 0
    %1346 = vmatpush1.bf16.msra.mxu0 %v263
    %1347 = vmatprep.subr.bf16.mxu0 0
    %1348 = vmatpush1.bf16.msra.mxu0 %v266
    %1349 = vmatprep.subr.bf16.mxu0 0
    %1350 = vmatpush1.bf16.msra.mxu0 %v269
    %1351 = vmatprep.subr.bf16.mxu0 0
    %1352 = vmatpush1.bf16.msra.mxu0 %v272
    %1353 = vmatprep.subr.bf16.mxu0 0
    %1354 = vmatpush1.bf16.msra.mxu0 %v275
    %1355 = vmatprep.subr.bf16.mxu0 0
    %1356 = vmatpush1.bf16.msra.mxu0 %v278
    %1357 = vmatprep.subr.bf16.mxu0 0
    %1358 = vmatpush1.bf16.msra.mxu0 %v281
    %1359 = vmatprep.subr.bf16.mxu0 0
    %1360 = vmatpush1.bf16.msra.mxu0 0
    %1361 = vmatprep.subr.bf16.mxu0 0
    %1362 = vmatpush1.bf16.msra.mxu0 0
    %1363 = vmatprep.subr.bf16.mxu0 0
    %1364 = vmatpush1.bf16.msra.mxu0 0
    %1365 = vmatprep.subr.bf16.mxu0 0
    %1366 = vmatpush1.bf16.msra.mxu0 0
    %1367 = vmatprep.subr.bf16.mxu0 0
    %1368 = vmatpush1.bf16.msra.mxu0 0
    %1369 = vmatprep.subr.bf16.mxu0 0
    %1370 = vmatpush1.bf16.msra.mxu0 0
    %1371 = vmatprep.subr.bf16.mxu0 0
    %1372 = vmatpush1.bf16.msra.mxu0 0
    %1373 = vmatprep.subr.bf16.mxu0 0
    %1374 = vmatpush1.bf16.msra.mxu0 0
    %1375 = vmatprep.mubr.bf16.mxu0 0
    %1376 = vmatmul.mubr.bf16.gmra.mrb[0].mxu0 %v1230
    %v1377 = vpop.f32.mrb[0].mxu0
    %v1378 = vadd.f32 %v174, %v1377
    %v1379 = vpop.f32.mrb[0].mxu0
    %v1380 = vpop.f32.mrb[0].mxu0
    %v1381 = vpop.f32.mrb[0].mxu0
    %1382 = vdwg.mxu0
    %s1383 = scalar_lea.vmem %s0, 24
    %v1384 = vld [vmem:[%s1383] sm:$0xff]
    %vm1385 = vcmp.ne.f32.partialorder %v1384, 0.0
    %s1386 = scalar_lea.vmem [#allocation2], 24
    %v1387 = vld [vmem:[%s1386] sm:$0xff]
    %v1388 = vsel %vm1385, 1, 0
    %1389 = vset.pattern.permute.xlu0 0
    %1390 = vperm.xlu0 %1389, %v1388
    %v1391 = vpop.permute.xlu0 %1390
    %vm1392 = vcmp.eq.s32.totalorder %v1391, 1
    %v1393 = vsel %vm1392, %v1387, %v1301
    %v1394 = vpack.c.bf16 %v1393, %v1393
    %1395 = vmatprep.subr.bf16.mxu0 %v494
    %1396 = vmatpush1.bf16.msra.mxu0 %v493
    %1397 = vmatprep.subr.bf16.mxu0 %v497
    %1398 = vmatpush1.bf16.msra.mxu0 %v496
    %1399 = vmatprep.subr.bf16.mxu0 %v500
    %1400 = vmatpush1.bf16.msra.mxu0 %v499
    %1401 = vmatprep.subr.bf16.mxu0 %v503
    %1402 = vmatpush1.bf16.msra.mxu0 %v502
    %1403 = vmatprep.subr.bf16.mxu0 %v506
    %1404 = vmatpush1.bf16.msra.mxu0 %v505
    %1405 = vmatprep.subr.bf16.mxu0 %v509
    %1406 = vmatpush1.bf16.msra.mxu0 %v508
    %1407 = vmatprep.subr.bf16.mxu0 %v512
    %1408 = vmatpush1.bf16.msra.mxu0 %v511
    %1409 = vmatprep.subr.bf16.mxu0 %v515
    %1410 = vmatpush1.bf16.msra.mxu0 %v514
    %1411 = vmatprep.subr.bf16.mxu0 0
    %1412 = vmatpush1.bf16.msra.mxu0 0
    %1413 = vmatprep.subr.bf16.mxu0 0
    %1414 = vmatpush1.bf16.msra.mxu0 0
    %1415 = vmatprep.subr.bf16.mxu0 0
    %1416 = vmatpush1.bf16.msra.mxu0 0
    %1417 = vmatprep.subr.bf16.mxu0 0
    %1418 = vmatpush1.bf16.msra.mxu0 0
    %1419 = vmatprep.subr.bf16.mxu0 0
    %1420 = vmatpush1.bf16.msra.mxu0 0
    %1421 = vmatprep.subr.bf16.mxu0 0
    %1422 = vmatpush1.bf16.msra.mxu0 0
    %1423 = vmatprep.subr.bf16.mxu0 0
    %1424 = vmatpush1.bf16.msra.mxu0 0
    %1425 = vmatprep.subr.bf16.mxu0 0
    %1426 = vmatpush1.bf16.msra.mxu0 0
    %1427 = vmatprep.mubr.bf16.mxu0 0
    %1428 = vmatmul.mubr.bf16.gmra.mrb[0].mxu0 %v1394
    %v1429 = vpop.f32.mrb[0].mxu0
    %v1430 = vadd.f32 %v401, %v1429
    %v1431 = vpop.f32.mrb[0].mxu0
    %v1432 = vadd.f32 %v405, %v1431
    %v1433 = vpop.f32.mrb[0].mxu0
    %v1434 = vpop.f32.mrb[0].mxu0
    %1435 = vdwg.mxu0
    %1436 = vmatprep.subr.bf16.mxu0 0
    %1437 = vmatpush1.bf16.msra.mxu0 %v495
    %1438 = vmatprep.subr.bf16.mxu0 0
    %1439 = vmatpush1.bf16.msra.mxu0 %v498
    %1440 = vmatprep.subr.bf16.mxu0 0
    %1441 = vmatpush1.bf16.msra.mxu0 %v501
    %1442 = vmatprep.subr.bf16.mxu0 0
    %1443 = vmatpush1.bf16.msra.mxu0 %v504
    %1444 = vmatprep.subr.bf16.mxu0 0
    %1445 = vmatpush1.bf16.msra.mxu0 %v507
    %1446 = vmatprep.subr.bf16.mxu0 0
    %1447 = vmatpush1.bf16.msra.mxu0 %v510
    %1448 = vmatprep.subr.bf16.mxu0 0
    %1449 = vmatpush1.bf16.msra.mxu0 %v513
    %1450 = vmatprep.subr.bf16.mxu0 0
    %1451 = vmatpush1.bf16.msra.mxu0 %v516
    %1452 = vmatprep.subr.bf16.mxu0 0
    %1453 = vmatpush1.bf16.msra.mxu0 0
    %1454 = vmatprep.subr.bf16.mxu0 0
    %1455 = vmatpush1.bf16.msra.mxu0 0
    %1456 = vmatprep.subr.bf16.mxu0 0
    %1457 = vmatpush1.bf16.msra.mxu0 0
    %1458 = vmatprep.subr.bf16.mxu0 0
    %1459 = vmatpush1.bf16.msra.mxu0 0
    %1460 = vmatprep.subr.bf16.mxu0 0
    %1461 = vmatpush1.bf16.msra.mxu0 0
    %1462 = vmatprep.subr.bf16.mxu0 0
    %1463 = vmatpush1.bf16.msra.mxu0 0
    %1464 = vmatprep.subr.bf16.mxu0 0
    %1465 = vmatpush1.bf16.msra.mxu0 0
    %1466 = vmatprep.subr.bf16.mxu0 0
    %1467 = vmatpush1.bf16.msra.mxu0 0
    %1468 = vmatprep.mubr.bf16.mxu0 0
    %1469 = vmatmul.mubr.bf16.gmra.mrb[0].mxu0 %v1394
    %v1470 = vpop.f32.mrb[0].mxu0
    %v1471 = vadd.f32 %v409, %v1470
    %v1472 = vpop.f32.mrb[0].mxu0
    %v1473 = vpop.f32.mrb[0].mxu0
    %v1474 = vpop.f32.mrb[0].mxu0
    %1475 = vdwg.mxu0
    %v1476 = vadd.f32 %v1430, %v1337
    %v1477 = vxor.u32 %v1476, 2147483648
    %v1478 = vmul.f32 %v1477, 1.442695
    %v1479 = vpow.pop %v1478
    %v1480 = vadd.f32 %v1479, 1.0
    %v1481 = vrcp.pop %v1480
    %v1482 = vmul.f32 1.0, %v1481
    %v1483 = vadd.f32 %v1432, %v1339
    %v1484 = vxor.u32 %v1483, 2147483648
    %v1485 = vmul.f32 %v1484, 1.442695
    %v1486 = vpow.pop %v1485
    %v1487 = vadd.f32 %v1486, 1.0
    %v1488 = vrcp.pop %v1487
    %v1489 = vmul.f32 1.0, %v1488
    %v1490 = vmul.f32 %v1482, %v1378
    %v1491 = vadd.f32 %v1471, %v1490
    %v1492 = vtanh.pop %v1491
    %v1493 = vsub.f32 1.0, %v1489
    %v1494 = vmul.f32 %v1493, %v1492
    %v1495 = vmul.f32 %v1489, %v1229
    %v1496 = vadd.f32 %v1494, %v1495
    %v1497 = vpack.c.bf16 %v1496, %v1496
    %1498 = vmatprep.subr.bf16.mxu0 0
    %1499 = vmatpush1.bf16.msra.mxu0 %v682
    %1500 = vmatprep.subr.bf16.mxu0 0
    %1501 = vmatpush1.bf16.msra.mxu0 %v683
    %1502 = vmatprep.subr.bf16.mxu0 0
    %1503 = vmatpush1.bf16.msra.mxu0 %v684
    %1504 = vmatprep.subr.bf16.mxu0 0
    %1505 = vmatpush1.bf16.msra.mxu0 %v685
    %1506 = vmatprep.subr.bf16.mxu0 0
    %1507 = vmatpush1.bf16.msra.mxu0 %v686
    %1508 = vmatprep.subr.bf16.mxu0 0
    %1509 = vmatpush1.bf16.msra.mxu0 %v687
    %1510 = vmatprep.subr.bf16.mxu0 0
    %1511 = vmatpush1.bf16.msra.mxu0 %v688
    %1512 = vmatprep.subr.bf16.mxu0 0
    %1513 = vmatpush1.bf16.msra.mxu0 %v689
    %1514 = vmatprep.subr.bf16.mxu0 0
    %1515 = vmatpush1.bf16.msra.mxu0 0
    %1516 = vmatprep.subr.bf16.mxu0 0
    %1517 = vmatpush1.bf16.msra.mxu0 0
    %1518 = vmatprep.subr.bf16.mxu0 0
    %1519 = vmatpush1.bf16.msra.mxu0 0
    %1520 = vmatprep.subr.bf16.mxu0 0
    %1521 = vmatpush1.bf16.msra.mxu0 0
    %1522 = vmatprep.subr.bf16.mxu0 0
    %1523 = vmatpush1.bf16.msra.mxu0 0
    %1524 = vmatprep.subr.bf16.mxu0 0
    %1525 = vmatpush1.bf16.msra.mxu0 0
    %1526 = vmatprep.subr.bf16.mxu0 0
    %1527 = vmatpush1.bf16.msra.mxu0 0
    %1528 = vmatprep.subr.bf16.mxu0 0
    %1529 = vmatpush1.bf16.msra.mxu0 0
    %1530 = vmatprep.mubr.bf16.mxu0 0
    %1531 = vmatmul.mubr.bf16.gmra.mrb[0].mxu0 %v1497
    %v1532 = vpop.f32.mrb[0].mxu0
    %v1533 = vadd.f32 %v648, %v1532
    %v1534 = vpop.f32.mrb[0].mxu0
    %v1535 = vpop.f32.mrb[0].mxu0
    %v1536 = vpop.f32.mrb[0].mxu0
    %1537 = vdwg.mxu0
    %1538 = vmax.xlane.f32.xlu0 %v1533
    %v1539 = vpop.xlane.xlu0 %1538
    %v1540 = vsub.f32 %v1533, %v1539
    %v1541 = vmul.f32 %v1540, 1.442695
    %v1542 = vpow.pop %v1541
    %1543 = vadd.xlane.f32.xlu0 %v1542
    %v1544 = vpop.xlane.xlu0 %1543
    %v1545 = vlog2.pop %v1544
    %v1546 = vmul.f32 %v1545, 0.6931472
    %v1547 = vsub.f32 %v1540, %v1546
    %s1548 = scalar_lea.vmem [#allocation8], 24
    %1549 = vst [vmem:[%s1548] sm:$0xff] %v1547
    %vm1550 = vcmp.ge.f32.partialorder %v1540, 0.0
    %v1551 = vsel %vm1550, %v159, 128
    %v1552 = vand.u32 %v1551, 65535
    %v1553 = vshra.s32 %v1551, 16
    %v1554 = vcvt.s32.f32 %v1552
    %v1555 = vcvt.s32.f32 %v1553
    %1556 = vmin.xlane.f32.xlu0 %v1555
    %v1557 = vpop.xlane.xlu0 %1556
    %vm1558 = vcmp.eq.f32.partialorder %v1555, %v1557
    %v1559 = vsel %vm1558, %v1554, inf
    %1560 = vmin.xlane.f32.xlu0 %v1559
    %v1561 = vpop.xlane.xlu0 %1560
    %v1562 = vcvt.f32.s32 %v1561
    %v1563 = vcvt.f32.s32 %v1557
    %v1564 = vshll.u32 %v1563, 16
    %v1565 = vadd.s32 %v1564, %v1562
    %vm1566 = vcmp.eq.s32.totalorder %v159, %v1565
    %v1567 = vsel %vm1566, 1, 0
    %v1568 = vcvt.s32.f32 %v1567
    %1569 = vmatprep.subr.bf16.mxu0 %v259
    %1570 = vmatpush1.bf16.msra.mxu0 %v258
    %1571 = vmatprep.subr.bf16.mxu0 %v262
    %1572 = vmatpush1.bf16.msra.mxu0 %v261
    %1573 = vmatprep.subr.bf16.mxu0 %v265
    %1574 = vmatpush1.bf16.msra.mxu0 %v264
    %1575 = vmatprep.subr.bf16.mxu0 %v268
    %1576 = vmatpush1.bf16.msra.mxu0 %v267
    %1577 = vmatprep.subr.bf16.mxu0 %v271
    %1578 = vmatpush1.bf16.msra.mxu0 %v270
    %1579 = vmatprep.subr.bf16.mxu0 %v274
    %1580 = vmatpush1.bf16.msra.mxu0 %v273
    %1581 = vmatprep.subr.bf16.mxu0 %v277
    %1582 = vmatpush1.bf16.msra.mxu0 %v276
    %1583 = vmatprep.subr.bf16.mxu0 %v280
    %1584 = vmatpush1.bf16.msra.mxu0 %v279
    %1585 = vmatprep.subr.bf16.mxu0 0
    %1586 = vmatpush1.bf16.msra.mxu0 0
    %1587 = vmatprep.subr.bf16.mxu0 0
    %1588 = vmatpush1.bf16.msra.mxu0 0
    %1589 = vmatprep.subr.bf16.mxu0 0
    %1590 = vmatpush1.bf16.msra.mxu0 0
    %1591 = vmatprep.subr.bf16.mxu0 0
    %1592 = vmatpush1.bf16.msra.mxu0 0
    %1593 = vmatprep.subr.bf16.mxu0 0
    %1594 = vmatpush1.bf16.msra.mxu0 0
    %1595 = vmatprep.subr.bf16.mxu0 0
    %1596 = vmatpush1.bf16.msra.mxu0 0
    %1597 = vmatprep.subr.bf16.mxu0 0
    %1598 = vmatpush1.bf16.msra.mxu0 0
    %1599 = vmatprep.subr.bf16.mxu0 0
    %1600 = vmatpush1.bf16.msra.mxu0 0
    %1601 = vmatprep.mubr.bf16.mxu0 0
    %1602 = vmatmul.mubr.bf16.gmra.mrb[0].mxu0 %v1497
    %v1603 = vpop.f32.mrb[0].mxu0
    %v1604 = vadd.f32 %v166, %v1603
    %v1605 = vpop.f32.mrb[0].mxu0
    %v1606 = vadd.f32 %v170, %v1605
    %v1607 = vpop.f32.mrb[0].mxu0
    %v1608 = vpop.f32.mrb[0].mxu0
    %1609 = vdwg.mxu0
    %1610 = vmatprep.subr.bf16.mxu0 0
    %1611 = vmatpush1.bf16.msra.mxu0 %v260
    %1612 = vmatprep.subr.bf16.mxu0 0
    %1613 = vmatpush1.bf16.msra.mxu0 %v263
    %1614 = vmatprep.subr.bf16.mxu0 0
    %1615 = vmatpush1.bf16.msra.mxu0 %v266
    %1616 = vmatprep.subr.bf16.mxu0 0
    %1617 = vmatpush1.bf16.msra.mxu0 %v269
    %1618 = vmatprep.subr.bf16.mxu0 0
    %1619 = vmatpush1.bf16.msra.mxu0 %v272
    %1620 = vmatprep.subr.bf16.mxu0 0
    %1621 = vmatpush1.bf16.msra.mxu0 %v275
    %1622 = vmatprep.subr.bf16.mxu0 0
    %1623 = vmatpush1.bf16.msra.mxu0 %v278
    %1624 = vmatprep.subr.bf16.mxu0 0
    %1625 = vmatpush1.bf16.msra.mxu0 %v281
    %1626 = vmatprep.subr.bf16.mxu0 0
    %1627 = vmatpush1.bf16.msra.mxu0 0
    %1628 = vmatprep.subr.bf16.mxu0 0
    %1629 = vmatpush1.bf16.msra.mxu0 0
    %1630 = vmatprep.subr.bf16.mxu0 0
    %1631 = vmatpush1.bf16.msra.mxu0 0
    %1632 = vmatprep.subr.bf16.mxu0 0
    %1633 = vmatpush1.bf16.msra.mxu0 0
    %1634 = vmatprep.subr.bf16.mxu0 0
    %1635 = vmatpush1.bf16.msra.mxu0 0
    %1636 = vmatprep.subr.bf16.mxu0 0
    %1637 = vmatpush1.bf16.msra.mxu0 0
    %1638 = vmatprep.subr.bf16.mxu0 0
    %1639 = vmatpush1.bf16.msra.mxu0 0
    %1640 = vmatprep.subr.bf16.mxu0 0
    %1641 = vmatpush1.bf16.msra.mxu0 0
    %1642 = vmatprep.mubr.bf16.mxu0 0
    %1643 = vmatmul.mubr.bf16.gmra.mrb[0].mxu0 %v1497
    %v1644 = vpop.f32.mrb[0].mxu0
    %v1645 = vadd.f32 %v174, %v1644
    %v1646 = vpop.f32.mrb[0].mxu0
    %v1647 = vpop.f32.mrb[0].mxu0
    %v1648 = vpop.f32.mrb[0].mxu0
    %1649 = vdwg.mxu0
    %s1650 = scalar_lea.vmem %s0, 32
    %v1651 = vld [vmem:[%s1650] sm:$0xff]
    %vm1652 = vcmp.ne.f32.partialorder %v1651, 0.0
    %s1653 = scalar_lea.vmem [#allocation2], 32
    %v1654 = vld [vmem:[%s1653] sm:$0xff]
    %v1655 = vsel %vm1652, 1, 0
    %1656 = vset.pattern.permute.xlu0 0
    %1657 = vperm.xlu0 %1656, %v1655
    %v1658 = vpop.permute.xlu0 %1657
    %vm1659 = vcmp.eq.s32.totalorder %v1658, 1
    %v1660 = vsel %vm1659, %v1654, %v1568
    %v1661 = vpack.c.bf16 %v1660, %v1660
    %1662 = vmatprep.subr.bf16.mxu0 %v494
    %1663 = vmatpush1.bf16.msra.mxu0 %v493
    %1664 = vmatprep.subr.bf16.mxu0 %v497
    %1665 = vmatpush1.bf16.msra.mxu0 %v496
    %1666 = vmatprep.subr.bf16.mxu0 %v500
    %1667 = vmatpush1.bf16.msra.mxu0 %v499
    %1668 = vmatprep.subr.bf16.mxu0 %v503
    %1669 = vmatpush1.bf16.msra.mxu0 %v502
    %1670 = vmatprep.subr.bf16.mxu0 %v506
    %1671 = vmatpush1.bf16.msra.mxu0 %v505
    %1672 = vmatprep.subr.bf16.mxu0 %v509
    %1673 = vmatpush1.bf16.msra.mxu0 %v508
    %1674 = vmatprep.subr.bf16.mxu0 %v512
    %1675 = vmatpush1.bf16.msra.mxu0 %v511
    %1676 = vmatprep.subr.bf16.mxu0 %v515
    %1677 = vmatpush1.bf16.msra.mxu0 %v514
    %1678 = vmatprep.subr.bf16.mxu0 0
    %1679 = vmatpush1.bf16.msra.mxu0 0
    %1680 = vmatprep.subr.bf16.mxu0 0
    %1681 = vmatpush1.bf16.msra.mxu0 0
    %1682 = vmatprep.subr.bf16.mxu0 0
    %1683 = vmatpush1.bf16.msra.mxu0 0
    %1684 = vmatprep.subr.bf16.mxu0 0
    %1685 = vmatpush1.bf16.msra.mxu0 0
    %1686 = vmatprep.subr.bf16.mxu0 0
    %1687 = vmatpush1.bf16.msra.mxu0 0
    %1688 = vmatprep.subr.bf16.mxu0 0
    %1689 = vmatpush1.bf16.msra.mxu0 0
    %1690 = vmatprep.subr.bf16.mxu0 0
    %1691 = vmatpush1.bf16.msra.mxu0 0
    %1692 = vmatprep.subr.bf16.mxu0 0
    %1693 = vmatpush1.bf16.msra.mxu0 0
    %1694 = vmatprep.mubr.bf16.mxu0 0
    %1695 = vmatmul.mubr.bf16.gmra.mrb[0].mxu0 %v1661
    %v1696 = vpop.f32.mrb[0].mxu0
    %v1697 = vadd.f32 %v401, %v1696
    %v1698 = vpop.f32.mrb[0].mxu0
    %v1699 = vadd.f32 %v405, %v1698
    %v1700 = vpop.f32.mrb[0].mxu0
    %v1701 = vpop.f32.mrb[0].mxu0
    %1702 = vdwg.mxu0
    %1703 = vmatprep.subr.bf16.mxu0 0
    %1704 = vmatpush1.bf16.msra.mxu0 %v495
    %1705 = vmatprep.subr.bf16.mxu0 0
    %1706 = vmatpush1.bf16.msra.mxu0 %v498
    %1707 = vmatprep.subr.bf16.mxu0 0
    %1708 = vmatpush1.bf16.msra.mxu0 %v501
    %1709 = vmatprep.subr.bf16.mxu0 0
    %1710 = vmatpush1.bf16.msra.mxu0 %v504
    %1711 = vmatprep.subr.bf16.mxu0 0
    %1712 = vmatpush1.bf16.msra.mxu0 %v507
    %1713 = vmatprep.subr.bf16.mxu0 0
    %1714 = vmatpush1.bf16.msra.mxu0 %v510
    %1715 = vmatprep.subr.bf16.mxu0 0
    %1716 = vmatpush1.bf16.msra.mxu0 %v513
    %1717 = vmatprep.subr.bf16.mxu0 0
    %1718 = vmatpush1.bf16.msra.mxu0 %v516
    %1719 = vmatprep.subr.bf16.mxu0 0
    %1720 = vmatpush1.bf16.msra.mxu0 0
    %1721 = vmatprep.subr.bf16.mxu0 0
    %1722 = vmatpush1.bf16.msra.mxu0 0
    %1723 = vmatprep.subr.bf16.mxu0 0
    %1724 = vmatpush1.bf16.msra.mxu0 0
    %1725 = vmatprep.subr.bf16.mxu0 0
    %1726 = vmatpush1.bf16.msra.mxu0 0
    %1727 = vmatprep.subr.bf16.mxu0 0
    %1728 = vmatpush1.bf16.msra.mxu0 0
    %1729 = vmatprep.subr.bf16.mxu0 0
    %1730 = vmatpush1.bf16.msra.mxu0 0
    %1731 = vmatprep.subr.bf16.mxu0 0
    %1732 = vmatpush1.bf16.msra.mxu0 0
    %1733 = vmatprep.subr.bf16.mxu0 0
    %1734 = vmatpush1.bf16.msra.mxu0 0
    %1735 = vmatprep.mubr.bf16.mxu0 0
    %1736 = vmatmul.mubr.bf16.gmra.mrb[0].mxu0 %v1661
    %v1737 = vpop.f32.mrb[0].mxu0
    %v1738 = vadd.f32 %v409, %v1737
    %v1739 = vpop.f32.mrb[0].mxu0
    %v1740 = vpop.f32.mrb[0].mxu0
    %v1741 = vpop.f32.mrb[0].mxu0
    %1742 = vdwg.mxu0
    %v1743 = vadd.f32 %v1697, %v1604
    %v1744 = vxor.u32 %v1743, 2147483648
    %v1745 = vmul.f32 %v1744, 1.442695
    %v1746 = vpow.pop %v1745
    %v1747 = vadd.f32 %v1746, 1.0
    %v1748 = vrcp.pop %v1747
    %v1749 = vmul.f32 1.0, %v1748
    %v1750 = vadd.f32 %v1699, %v1606
    %v1751 = vxor.u32 %v1750, 2147483648
    %v1752 = vmul.f32 %v1751, 1.442695
    %v1753 = vpow.pop %v1752
    %v1754 = vadd.f32 %v1753, 1.0
    %v1755 = vrcp.pop %v1754
    %v1756 = vmul.f32 1.0, %v1755
    %v1757 = vmul.f32 %v1749, %v1645
    %v1758 = vadd.f32 %v1738, %v1757
    %v1759 = vtanh.pop %v1758
    %v1760 = vsub.f32 1.0, %v1756
    %v1761 = vmul.f32 %v1760, %v1759
    %v1762 = vmul.f32 %v1756, %v1496
    %v1763 = vadd.f32 %v1761, %v1762
    %v1764 = vpack.c.bf16 %v1763, %v1763
    %1765 = vmatprep.subr.bf16.mxu0 0
    %1766 = vmatpush1.bf16.msra.mxu0 %v682
    %1767 = vmatprep.subr.bf16.mxu0 0
    %1768 = vmatpush1.bf16.msra.mxu0 %v683
    %1769 = vmatprep.subr.bf16.mxu0 0
    %1770 = vmatpush1.bf16.msra.mxu0 %v684
    %1771 = vmatprep.subr.bf16.mxu0 0
    %1772 = vmatpush1.bf16.msra.mxu0 %v685
    %1773 = vmatprep.subr.bf16.mxu0 0
    %1774 = vmatpush1.bf16.msra.mxu0 %v686
    %1775 = vmatprep.subr.bf16.mxu0 0
    %1776 = vmatpush1.bf16.msra.mxu0 %v687
    %1777 = vmatprep.subr.bf16.mxu0 0
    %1778 = vmatpush1.bf16.msra.mxu0 %v688
    %1779 = vmatprep.subr.bf16.mxu0 0
    %1780 = vmatpush1.bf16.msra.mxu0 %v689
    %1781 = vmatprep.subr.bf16.mxu0 0
    %1782 = vmatpush1.bf16.msra.mxu0 0
    %1783 = vmatprep.subr.bf16.mxu0 0
    %1784 = vmatpush1.bf16.msra.mxu0 0
    %1785 = vmatprep.subr.bf16.mxu0 0
    %1786 = vmatpush1.bf16.msra.mxu0 0
    %1787 = vmatprep.subr.bf16.mxu0 0
    %1788 = vmatpush1.bf16.msra.mxu0 0
    %1789 = vmatprep.subr.bf16.mxu0 0
    %1790 = vmatpush1.bf16.msra.mxu0 0
    %1791 = vmatprep.subr.bf16.mxu0 0
    %1792 = vmatpush1.bf16.msra.mxu0 0
    %1793 = vmatprep.subr.bf16.mxu0 0
    %1794 = vmatpush1.bf16.msra.mxu0 0
    %1795 = vmatprep.subr.bf16.mxu0 0
    %1796 = vmatpush1.bf16.msra.mxu0 0
    %1797 = vmatprep.mubr.bf16.mxu0 0
    %1798 = vmatmul.mubr.bf16.gmra.mrb[0].mxu0 %v1764
    %v1799 = vpop.f32.mrb[0].mxu0
    %v1800 = vadd.f32 %v648, %v1799
    %v1801 = vpop.f32.mrb[0].mxu0
    %v1802 = vpop.f32.mrb[0].mxu0
    %v1803 = vpop.f32.mrb[0].mxu0
    %1804 = vdwg.mxu0
    %1805 = vmax.xlane.f32.xlu0 %v1800
    %v1806 = vpop.xlane.xlu0 %1805
    %v1807 = vsub.f32 %v1800, %v1806
    %v1808 = vmul.f32 %v1807, 1.442695
    %v1809 = vpow.pop %v1808
    %1810 = vadd.xlane.f32.xlu0 %v1809
    %v1811 = vpop.xlane.xlu0 %1810
    %v1812 = vlog2.pop %v1811
    %v1813 = vmul.f32 %v1812, 0.6931472
    %v1814 = vsub.f32 %v1807, %v1813
    %s1815 = scalar_lea.vmem [#allocation8], 32
    %1816 = vst [vmem:[%s1815] sm:$0xff] %v1814
    %vm1817 = vcmp.ge.f32.partialorder %v1807, 0.0
    %v1818 = vsel %vm1817, %v159, 128
    %v1819 = vand.u32 %v1818, 65535
    %v1820 = vshra.s32 %v1818, 16
    %v1821 = vcvt.s32.f32 %v1819
    %v1822 = vcvt.s32.f32 %v1820
    %1823 = vmin.xlane.f32.xlu0 %v1822
    %v1824 = vpop.xlane.xlu0 %1823
    %vm1825 = vcmp.eq.f32.partialorder %v1822, %v1824
    %v1826 = vsel %vm1825, %v1821, inf
    %1827 = vmin.xlane.f32.xlu0 %v1826
    %v1828 = vpop.xlane.xlu0 %1827
    %v1829 = vcvt.f32.s32 %v1828
    %v1830 = vcvt.f32.s32 %v1824
    %v1831 = vshll.u32 %v1830, 16
    %v1832 = vadd.s32 %v1831, %v1829
    %vm1833 = vcmp.eq.s32.totalorder %v159, %v1832
    %v1834 = vsel %vm1833, 1, 0
    %v1835 = vcvt.s32.f32 %v1834
    %1836 = vmatprep.subr.bf16.mxu0 %v259
    %1837 = vmatpush1.bf16.msra.mxu0 %v258
    %1838 = vmatprep.subr.bf16.mxu0 %v262
    %1839 = vmatpush1.bf16.msra.mxu0 %v261
    %1840 = vmatprep.subr.bf16.mxu0 %v265
    %1841 = vmatpush1.bf16.msra.mxu0 %v264
    %1842 = vmatprep.subr.bf16.mxu0 %v268
    %1843 = vmatpush1.bf16.msra.mxu0 %v267
    %1844 = vmatprep.subr.bf16.mxu0 %v271
    %1845 = vmatpush1.bf16.msra.mxu0 %v270
    %1846 = vmatprep.subr.bf16.mxu0 %v274
    %1847 = vmatpush1.bf16.msra.mxu0 %v273
    %1848 = vmatprep.subr.bf16.mxu0 %v277
    %1849 = vmatpush1.bf16.msra.mxu0 %v276
    %1850 = vmatprep.subr.bf16.mxu0 %v280
    %1851 = vmatpush1.bf16.msra.mxu0 %v279
    %1852 = vmatprep.subr.bf16.mxu0 0
    %1853 = vmatpush1.bf16.msra.mxu0 0
    %1854 = vmatprep.subr.bf16.mxu0 0
    %1855 = vmatpush1.bf16.msra.mxu0 0
    %1856 = vmatprep.subr.bf16.mxu0 0
    %1857 = vmatpush1.bf16.msra.mxu0 0
    %1858 = vmatprep.subr.bf16.mxu0 0
    %1859 = vmatpush1.bf16.msra.mxu0 0
    %1860 = vmatprep.subr.bf16.mxu0 0
    %1861 = vmatpush1.bf16.msra.mxu0 0
    %1862 = vmatprep.subr.bf16.mxu0 0
    %1863 = vmatpush1.bf16.msra.mxu0 0
    %1864 = vmatprep.subr.bf16.mxu0 0
    %1865 = vmatpush1.bf16.msra.mxu0 0
    %1866 = vmatprep.subr.bf16.mxu0 0
    %1867 = vmatpush1.bf16.msra.mxu0 0
    %1868 = vmatprep.mubr.bf16.mxu0 0
    %1869 = vmatmul.mubr.bf16.gmra.mrb[0].mxu0 %v1764
    %v1870 = vpop.f32.mrb[0].mxu0
    %v1871 = vadd.f32 %v166, %v1870
    %v1872 = vpop.f32.mrb[0].mxu0
    %v1873 = vadd.f32 %v170, %v1872
    %v1874 = vpop.f32.mrb[0].mxu0
    %v1875 = vpop.f32.mrb[0].mxu0
    %1876 = vdwg.mxu0
    %1877 = vmatprep.subr.bf16.mxu0 0
    %1878 = vmatpush1.bf16.msra.mxu0 %v260
    %1879 = vmatprep.subr.bf16.mxu0 0
    %1880 = vmatpush1.bf16.msra.mxu0 %v263
    %1881 = vmatprep.subr.bf16.mxu0 0
    %1882 = vmatpush1.bf16.msra.mxu0 %v266
    %1883 = vmatprep.subr.bf16.mxu0 0
    %1884 = vmatpush1.bf16.msra.mxu0 %v269
    %1885 = vmatprep.subr.bf16.mxu0 0
    %1886 = vmatpush1.bf16.msra.mxu0 %v272
    %1887 = vmatprep.subr.bf16.mxu0 0
    %1888 = vmatpush1.bf16.msra.mxu0 %v275
    %1889 = vmatprep.subr.bf16.mxu0 0
    %1890 = vmatpush1.bf16.msra.mxu0 %v278
    %1891 = vmatprep.subr.bf16.mxu0 0
    %1892 = vmatpush1.bf16.msra.mxu0 %v281
    %1893 = vmatprep.subr.bf16.mxu0 0
    %1894 = vmatpush1.bf16.msra.mxu0 0
    %1895 = vmatprep.subr.bf16.mxu0 0
    %1896 = vmatpush1.bf16.msra.mxu0 0
    %1897 = vmatprep.subr.bf16.mxu0 0
    %1898 = vmatpush1.bf16.msra.mxu0 0
    %1899 = vmatprep.subr.bf16.mxu0 0
    %1900 = vmatpush1.bf16.msra.mxu0 0
    %1901 = vmatprep.subr.bf16.mxu0 0
    %1902 = vmatpush1.bf16.msra.mxu0 0
    %1903 = vmatprep.subr.bf16.mxu0 0
    %1904 = vmatpush1.bf16.msra.mxu0 0
    %1905 = vmatprep.subr.bf16.mxu0 0
    %1906 = vmatpush1.bf16.msra.mxu0 0
    %1907 = vmatprep.subr.bf16.mxu0 0
    %1908 = vmatpush1.bf16.msra.mxu0 0
    %1909 = vmatprep.mubr.bf16.mxu0 0
    %1910 = vmatmul.mubr.bf16.gmra.mrb[0].mxu0 %v1764
    %v1911 = vpop.f32.mrb[0].mxu0
    %v1912 = vadd.f32 %v174, %v1911
    %v1913 = vpop.f32.mrb[0].mxu0
    %v1914 = vpop.f32.mrb[0].mxu0
    %v1915 = vpop.f32.mrb[0].mxu0
    %1916 = vdwg.mxu0
    %s1917 = scalar_lea.vmem %s0, 40
    %v1918 = vld [vmem:[%s1917] sm:$0xff]
    %vm1919 = vcmp.ne.f32.partialorder %v1918, 0.0
    %s1920 = scalar_lea.vmem [#allocation2], 40
    %v1921 = vld [vmem:[%s1920] sm:$0xff]
    %v1922 = vsel %vm1919, 1, 0
    %1923 = vset.pattern.permute.xlu0 0
    %1924 = vperm.xlu0 %1923, %v1922
    %v1925 = vpop.permute.xlu0 %1924
    %vm1926 = vcmp.eq.s32.totalorder %v1925, 1
    %v1927 = vsel %vm1926, %v1921, %v1835
    %v1928 = vpack.c.bf16 %v1927, %v1927
    %1929 = vmatprep.subr.bf16.mxu0 %v494
    %1930 = vmatpush1.bf16.msra.mxu0 %v493
    %1931 = vmatprep.subr.bf16.mxu0 %v497
    %1932 = vmatpush1.bf16.msra.mxu0 %v496
    %1933 = vmatprep.subr.bf16.mxu0 %v500
    %1934 = vmatpush1.bf16.msra.mxu0 %v499
    %1935 = vmatprep.subr.bf16.mxu0 %v503
    %1936 = vmatpush1.bf16.msra.mxu0 %v502
    %1937 = vmatprep.subr.bf16.mxu0 %v506
    %1938 = vmatpush1.bf16.msra.mxu0 %v505
    %1939 = vmatprep.subr.bf16.mxu0 %v509
    %1940 = vmatpush1.bf16.msra.mxu0 %v508
    %1941 = vmatprep.subr.bf16.mxu0 %v512
    %1942 = vmatpush1.bf16.msra.mxu0 %v511
    %1943 = vmatprep.subr.bf16.mxu0 %v515
    %1944 = vmatpush1.bf16.msra.mxu0 %v514
    %1945 = vmatprep.subr.bf16.mxu0 0
    %1946 = vmatpush1.bf16.msra.mxu0 0
    %1947 = vmatprep.subr.bf16.mxu0 0
    %1948 = vmatpush1.bf16.msra.mxu0 0
    %1949 = vmatprep.subr.bf16.mxu0 0
    %1950 = vmatpush1.bf16.msra.mxu0 0
    %1951 = vmatprep.subr.bf16.mxu0 0
    %1952 = vmatpush1.bf16.msra.mxu0 0
    %1953 = vmatprep.subr.bf16.mxu0 0
    %1954 = vmatpush1.bf16.msra.mxu0 0
    %1955 = vmatprep.subr.bf16.mxu0 0
    %1956 = vmatpush1.bf16.msra.mxu0 0
    %1957 = vmatprep.subr.bf16.mxu0 0
    %1958 = vmatpush1.bf16.msra.mxu0 0
    %1959 = vmatprep.subr.bf16.mxu0 0
    %1960 = vmatpush1.bf16.msra.mxu0 0
    %1961 = vmatprep.mubr.bf16.mxu0 0
    %1962 = vmatmul.mubr.bf16.gmra.mrb[0].mxu0 %v1928
    %v1963 = vpop.f32.mrb[0].mxu0
    %v1964 = vadd.f32 %v401, %v1963
    %v1965 = vpop.f32.mrb[0].mxu0
    %v1966 = vadd.f32 %v405, %v1965
    %v1967 = vpop.f32.mrb[0].mxu0
    %v1968 = vpop.f32.mrb[0].mxu0
    %1969 = vdwg.mxu0
    %1970 = vmatprep.subr.bf16.mxu0 0
    %1971 = vmatpush1.bf16.msra.mxu0 %v495
    %1972 = vmatprep.subr.bf16.mxu0 0
    %1973 = vmatpush1.bf16.msra.mxu0 %v498
    %1974 = vmatprep.subr.bf16.mxu0 0
    %1975 = vmatpush1.bf16.msra.mxu0 %v501
    %1976 = vmatprep.subr.bf16.mxu0 0
    %1977 = vmatpush1.bf16.msra.mxu0 %v504
    %1978 = vmatprep.subr.bf16.mxu0 0
    %1979 = vmatpush1.bf16.msra.mxu0 %v507
    %1980 = vmatprep.subr.bf16.mxu0 0
    %1981 = vmatpush1.bf16.msra.mxu0 %v510
    %1982 = vmatprep.subr.bf16.mxu0 0
    %1983 = vmatpush1.bf16.msra.mxu0 %v513
    %1984 = vmatprep.subr.bf16.mxu0 0
    %1985 = vmatpush1.bf16.msra.mxu0 %v516
    %1986 = vmatprep.subr.bf16.mxu0 0
    %1987 = vmatpush1.bf16.msra.mxu0 0
    %1988 = vmatprep.subr.bf16.mxu0 0
    %1989 = vmatpush1.bf16.msra.mxu0 0
    %1990 = vmatprep.subr.bf16.mxu0 0
    %1991 = vmatpush1.bf16.msra.mxu0 0
    %1992 = vmatprep.subr.bf16.mxu0 0
    %1993 = vmatpush1.bf16.msra.mxu0 0
    %1994 = vmatprep.subr.bf16.mxu0 0
    %1995 = vmatpush1.bf16.msra.mxu0 0
    %1996 = vmatprep.subr.bf16.mxu0 0
    %1997 = vmatpush1.bf16.msra.mxu0 0
    %1998 = vmatprep.subr.bf16.mxu0 0
    %1999 = vmatpush1.bf16.msra.mxu0 0
    %2000 = vmatprep.subr.bf16.mxu0 0
    %2001 = vmatpush1.bf16.msra.mxu0 0
    %2002 = vmatprep.mubr.bf16.mxu0 0
    %2003 = vmatmul.mubr.bf16.gmra.mrb[0].mxu0 %v1928
    %v2004 = vpop.f32.mrb[0].mxu0
    %v2005 = vadd.f32 %v409, %v2004
    %v2006 = vpop.f32.mrb[0].mxu0
    %v2007 = vpop.f32.mrb[0].mxu0
    %v2008 = vpop.f32.mrb[0].mxu0
    %2009 = vdwg.mxu0
    %v2010 = vadd.f32 %v1964, %v1871
    %v2011 = vxor.u32 %v2010, 2147483648
    %v2012 = vmul.f32 %v2011, 1.442695
    %v2013 = vpow.pop %v2012
    %v2014 = vadd.f32 %v2013, 1.0
    %v2015 = vrcp.pop %v2014
    %v2016 = vmul.f32 1.0, %v2015
    %v2017 = vadd.f32 %v1966, %v1873
    %v2018 = vxor.u32 %v2017, 2147483648
    %v2019 = vmul.f32 %v2018, 1.442695
    %v2020 = vpow.pop %v2019
    %v2021 = vadd.f32 %v2020, 1.0
    %v2022 = vrcp.pop %v2021
    %v2023 = vmul.f32 1.0, %v2022
    %v2024 = vmul.f32 %v2016, %v1912
    %v2025 = vadd.f32 %v2005, %v2024
    %v2026 = vtanh.pop %v2025
    %v2027 = vsub.f32 1.0, %v2023
    %v2028 = vmul.f32 %v2027, %v2026
    %v2029 = vmul.f32 %v2023, %v1763
    %v2030 = vadd.f32 %v2028, %v2029
    %v2031 = vpack.c.bf16 %v2030, %v2030
    %2032 = vmatprep.subr.bf16.mxu0 0
    %2033 = vmatpush1.bf16.msra.mxu0 %v682
    %2034 = vmatprep.subr.bf16.mxu0 0
    %2035 = vmatpush1.bf16.msra.mxu0 %v683
    %2036 = vmatprep.subr.bf16.mxu0 0
    %2037 = vmatpush1.bf16.msra.mxu0 %v684
    %2038 = vmatprep.subr.bf16.mxu0 0
    %2039 = vmatpush1.bf16.msra.mxu0 %v685
    %2040 = vmatprep.subr.bf16.mxu0 0
    %2041 = vmatpush1.bf16.msra.mxu0 %v686
    %2042 = vmatprep.subr.bf16.mxu0 0
    %2043 = vmatpush1.bf16.msra.mxu0 %v687
    %2044 = vmatprep.subr.bf16.mxu0 0
    %2045 = vmatpush1.bf16.msra.mxu0 %v688
    %2046 = vmatprep.subr.bf16.mxu0 0
    %2047 = vmatpush1.bf16.msra.mxu0 %v689
    %2048 = vmatprep.subr.bf16.mxu0 0
    %2049 = vmatpush1.bf16.msra.mxu0 0
    %2050 = vmatprep.subr.bf16.mxu0 0
    %2051 = vmatpush1.bf16.msra.mxu0 0
    %2052 = vmatprep.subr.bf16.mxu0 0
    %2053 = vmatpush1.bf16.msra.mxu0 0
    %2054 = vmatprep.subr.bf16.mxu0 0
    %2055 = vmatpush1.bf16.msra.mxu0 0
    %2056 = vmatprep.subr.bf16.mxu0 0
    %2057 = vmatpush1.bf16.msra.mxu0 0
    %2058 = vmatprep.subr.bf16.mxu0 0
    %2059 = vmatpush1.bf16.msra.mxu0 0
    %2060 = vmatprep.subr.bf16.mxu0 0
    %2061 = vmatpush1.bf16.msra.mxu0 0
    %2062 = vmatprep.subr.bf16.mxu0 0
    %2063 = vmatpush1.bf16.msra.mxu0 0
    %2064 = vmatprep.mubr.bf16.mxu0 0
    %2065 = vmatmul.mubr.bf16.gmra.mrb[0].mxu0 %v2031
    %v2066 = vpop.f32.mrb[0].mxu0
    %v2067 = vadd.f32 %v648, %v2066
    %v2068 = vpop.f32.mrb[0].mxu0
    %v2069 = vpop.f32.mrb[0].mxu0
    %v2070 = vpop.f32.mrb[0].mxu0
    %2071 = vdwg.mxu0
    %2072 = vmax.xlane.f32.xlu0 %v2067
    %v2073 = vpop.xlane.xlu0 %2072
    %v2074 = vsub.f32 %v2067, %v2073
    %v2075 = vmul.f32 %v2074, 1.442695
    %v2076 = vpow.pop %v2075
    %2077 = vadd.xlane.f32.xlu0 %v2076
    %v2078 = vpop.xlane.xlu0 %2077
    %v2079 = vlog2.pop %v2078
    %v2080 = vmul.f32 %v2079, 0.6931472
    %v2081 = vsub.f32 %v2074, %v2080
    %s2082 = scalar_lea.vmem [#allocation8], 40
    %2083 = vst [vmem:[%s2082] sm:$0xff] %v2081
    // Predicated region
    $region50: #{tpu_custom_call.1} parent=1 // pred_check
      _
    $region51: #{tpu_custom_call.1} parent=1 // pred_check_branch
      %2085 = sbr.rel (0) target = $region53
    $region52: #{tpu_custom_call.1} parent=1 // pred_region
      %s2087 = ssub.s32 768, 768
      %2088 = vsyncadd [#allocation4], %s2087
      %s2089 = sshll.u32 [#allocation8], 4
      %s2090 = int_to_ptr.vmem [resolvable:$true] %s2089
      %2095 = dma.vmem_to_hbm [thread:$0]  %s2090, 768, %s9, [#allocation4], 128, 128, 8
    $region53: #{tpu_custom_call.1} parent=1 // pred_fallthru
      _
    // Predicated region
    $region54: #{tpu_custom_call.1} parent=1 // pred_check
      _
    $region55: #{tpu_custom_call.1} parent=1 // pred_check_branch
      %2097 = sbr.rel (0) target = $region57
    $region56: #{tpu_custom_call.1} parent=1 // pred_region
      %2098 = dma.done [#allocation4], 768
    $region57: #{tpu_custom_call.1} parent=1 // pred_fallthru
      _
    %2099 = vsyncpa [#allocation3], 1
    %2100 = vsyncpa [#allocation6], 1
    %2101 = vsyncpa [#allocation4], 1

</llo_original>
